<compile_context>
chip_gen: v7x
topology: tpu7x:2x2x1
jax: 0.10.0
libtpu: 0.0.40
codegen_flags: <defaults>
</compile_context>

<pallas_src>
import functools

import jax
import jax.numpy as jnp
import numpy as np
from jax.experimental import pallas as pl
from jax.experimental.pallas import tpu as pltpu

NUM_LAYERS = 5
LANE = 128


def _gcn2_kernel(adj_ref, x_ref, wcat_ref, brel_ref, wlin_ref, blin_ref,
                 out_ref, *, num_layers):
    """Fused GCN2 forward for one graph (grid axis = graph index).

    adj_ref : (N, N)        bf16   A[dst, src] = edge multiplicity
    x_ref   : (N, Cp)       f32    zero-padded node features
    wcat_ref: (L, 2Cp, Cp)  bf16   per-layer [W_rel ; W_root] stacked on K
    brel_ref: (L, 1, Cp)    f32
    wlin_ref: (Cp, Op)      bf16
    blin_ref: (1, Op)       f32
    out_ref : (N, Op)       f32    lane-dense output (sliced to O outside)
    """
    adj = adj_ref[...]                      # (N, N) bf16
    x = x_ref[...]                          # (N, Cp) f32 master copy

    for l in range(num_layers):             # unrolled: identical shapes per layer
        x_bf = x.astype(jnp.bfloat16)       # single bf16 cast per layer
        # Neighborhood aggregation: agg = A @ X on the MXU (bf16 in, f32 acc).
        agg = jnp.dot(adj, x_bf, preferred_element_type=jnp.float32)  # (N, Cp)
        # Fused LHS [agg | x] built in registers (concat at a 128-lane
        # boundary); one MXU dot with K = 2*Cp replaces the two matmuls.
        lhs = jnp.concatenate([agg.astype(jnp.bfloat16), x_bf], axis=-1)
        h = jnp.dot(lhs, wcat_ref[l],
                    preferred_element_type=jnp.float32) + brel_ref[l]
        x = x + h                            # residual in f32
        if l < num_layers - 1:               # no ReLU after conv5
            x = jnp.maximum(x, 0.0)

    # Final Linear: x @ W_lin + b_lin (bf16 MXU, f32 accumulate/bias).
    out_ref[...] = (jnp.dot(x.astype(jnp.bfloat16), wlin_ref[...],
                            preferred_element_type=jnp.float32)
                    + blin_ref[...])


def _round_up(v, m):
    return ((v + m - 1) // m) * m


def gcn2_forward(adj, x, w_rel, w_root, b_rel, w_lin, b_lin):
    """adj: (B, N, N) float, x: (B, N, C); weights shared across graphs."""
    B, N, C = x.shape
    L = w_rel.shape[0]
    O = w_lin.shape[1]
    Cp = _round_up(C, LANE)
    Op = _round_up(O, LANE)

    # --- host-side prep: lane-pad channels, fuse per-layer weights, bf16 ---
    x_p = jnp.pad(x, ((0, 0), (0, 0), (0, Cp - C))).astype(jnp.float32)
    adj_b = adj.astype(jnp.bfloat16)                  # exact for small edge counts
    w_rel_p = jnp.pad(w_rel, ((0, 0), (0, Cp - C), (0, Cp - C)))
    w_root_p = jnp.pad(w_root, ((0, 0), (0, Cp - C), (0, Cp - C)))
    w_cat = jnp.concatenate([w_rel_p, w_root_p], axis=1).astype(jnp.bfloat16)
    b_rel_p = jnp.pad(b_rel, ((0, 0), (0, 0), (0, Cp - C))).astype(jnp.float32)
    w_lin_p = jnp.pad(w_lin, ((0, Cp - C), (0, Op - O))).astype(jnp.bfloat16)
    b_lin_p = jnp.pad(b_lin, ((0, 0), (0, Op - O))).astype(jnp.float32)

    kernel = functools.partial(_gcn2_kernel, num_layers=L)
    out_p = pl.pallas_call(
        kernel,
        out_shape=jax.ShapeDtypeStruct((B, N, Op), jnp.float32),
        grid=(B,),
        in_specs=[
            pl.BlockSpec((None, N, N), lambda b: (b, 0, 0)),
            pl.BlockSpec((None, N, Cp), lambda b: (b, 0, 0)),
            # Weight index maps are constant across the grid -> kept resident.
            pl.BlockSpec((L, 2 * Cp, Cp), lambda b: (0, 0, 0)),
            pl.BlockSpec((L, 1, Cp), lambda b: (0, 0, 0)),
            pl.BlockSpec((Cp, Op), lambda b: (0, 0)),
            pl.BlockSpec((1, Op), lambda b: (0, 0)),
        ],
        out_specs=pl.BlockSpec((None, N, Op), lambda b: (b, 0, 0)),
        compiler_params=pltpu.CompilerParams(
            dimension_semantics=("parallel",)),
    )(adj_b, x_p, w_cat, b_rel_p, w_lin_p, b_lin_p)
    return out_p[..., :O]


def edge_index_to_dense_adj(edge_index, num_nodes):
    """edge_index: (2, E) int32, row 0 = source j, row 1 = target i."""
    src, dst = edge_index[0], edge_index[1]
    adj = jnp.zeros((num_nodes, num_nodes), jnp.float32)
    return adj.at[dst, src].add(1.0)


def gcn2_reference_f32(adj, x, w_rel, w_root, b_rel, w_lin, b_lin):
    """Pure-f32 reference (original module semantics), batched over graphs."""
    L = w_rel.shape[0]
    for l in range(L):
        h = jnp.matmul(adj, x) @ w_rel[l] + x @ w_root[l] + b_rel[l]
        x = x + h
        if l < L - 1:
            x = jnp.maximum(x, 0.0)
    return x @ w_lin + b_lin


def gcn2_reference_bf16(adj, x, w_rel, w_root, b_rel, w_lin, b_lin):
    """Pure-JAX reference mirroring the kernel's mixed-precision scheme."""
    L = w_rel.shape[0]
    adj_b = adj.astype(jnp.bfloat16)
    for l in range(L):
        x_bf = x.astype(jnp.bfloat16)
        agg = jnp.matmul(adj_b, x_bf, preferred_element_type=jnp.float32)
        h = (jnp.matmul(agg.astype(jnp.bfloat16), w_rel[l].astype(jnp.bfloat16),
                        preferred_element_type=jnp.float32)
             + jnp.matmul(x_bf, w_root[l].astype(jnp.bfloat16),
                          preferred_element_type=jnp.float32)
             + b_rel[l])
        x = x + h
        if l < L - 1:
            x = jnp.maximum(x, 0.0)
    return (jnp.matmul(x.astype(jnp.bfloat16), w_lin.astype(jnp.bfloat16),
                       preferred_element_type=jnp.float32) + b_lin)


if __name__ == "__main__":
    # Small synthetic batched problem.
    B = 4                  # graphs (grid axis, "parallel")
    N = 16                 # nodes per graph
    E = 48                 # edges per graph
    C = 32                 # input_channels == hidden_channels (residual requires it)
    O = 8                  # output_channels

    key = jax.random.PRNGKey(0)
    kx, ke, *kw = jax.random.split(key, 2 + 2 * NUM_LAYERS + 2)

    x = jax.random.normal(kx, (B, N, C), jnp.float32)
    edge_index = jax.random.randint(ke, (B, 2, E), 0, N, jnp.int32)
    adj = jax.vmap(lambda ei: edge_index_to_dense_adj(ei, N))(edge_index)

    scale = 0.1 / np.sqrt(C)
    # GraphConv weights (pre-transposed to [C_in, C_out]), stacked over layers.
    w_rel = jnp.stack([jax.random.normal(kw[2 * l], (C, C), jnp.float32) * scale
                       for l in range(NUM_LAYERS)])
    w_root = jnp.stack([jax.random.normal(kw[2 * l + 1], (C, C), jnp.float32) * scale
                        for l in range(NUM_LAYERS)])
    b_rel = jnp.zeros((NUM_LAYERS, 1, C), jnp.float32) + 0.01
    # Final Linear (pre-transposed).
    w_lin = jax.random.normal(kw[-2], (C, O), jnp.float32) * scale
    b_lin = jax.random.normal(kw[-1], (1, O), jnp.float32) * 0.01

    out = gcn2_forward(adj, x, w_rel, w_root, b_rel, w_lin, b_lin)
    out = jax.block_until_ready(out)

    # Tight check: kernel vs a pure-JAX reference using the same bf16/f32
    # mixed-precision scheme (zero padding is exact, so shapes can differ).
    ref_bf16 = gcn2_reference_bf16(adj, x, w_rel, w_root, b_rel, w_lin, b_lin)
    np.testing.assert_allclose(np.asarray(out), np.asarray(ref_bf16),
                               rtol=1e-3, atol=1e-4)

    # Loose check: kernel vs the full-f32 original-module semantics
    # (difference is only bf16 rounding on the MXU operands).
    ref_f32 = gcn2_reference_f32(adj, x, w_rel, w_root, b_rel, w_lin, b_lin)
    np.testing.assert_allclose(np.asarray(out), np.asarray(ref_f32),
                               rtol=3e-2, atol=1e-2)

    print("KERNEL_OK")
</pallas_src>

<mosaic_0001>
module attributes {stable_mosaic.version = 11 : i64} {
  func.func @_gcn2_kernel(%arg0: i32, %arg1: memref<1x16x16xbf16, #tpu.memory_space<vmem>>, %arg2: memref<1x16x128xf32, #tpu.memory_space<vmem>>, %arg3: memref<5x256x128xbf16, #tpu.memory_space<vmem>>, %arg4: memref<5x1x128xf32, #tpu.memory_space<vmem>>, %arg5: memref<128x128xbf16, #tpu.memory_space<vmem>>, %arg6: memref<1x128xf32, #tpu.memory_space<vmem>>, %arg7: memref<1x16x128xf32, #tpu.memory_space<vmem>>) attributes {dimension_semantics = [#tpu.dimension_semantics<parallel>], iteration_bounds = array<i64: 4>, scalar_prefetch = 0 : i64, scratch_operands = 0 : i64, tpu.core_type = #tpu.core_type<tc>, window_params = [{transform_indices = @transform_0, window_bounds = array<i64: 1, 16, 16>}, {transform_indices = @transform_1, window_bounds = array<i64: 1, 16, 128>}, {pipeline_mode = #tpu.pipeline_mode<synchronous>, transform_indices = @transform_2, window_bounds = array<i64: 5, 256, 128>}, {pipeline_mode = #tpu.pipeline_mode<synchronous>, transform_indices = @transform_3, window_bounds = array<i64: 5, 1, 128>}, {pipeline_mode = #tpu.pipeline_mode<synchronous>, transform_indices = @transform_4, window_bounds = array<i64: 128, 128>}, {pipeline_mode = #tpu.pipeline_mode<synchronous>, transform_indices = @transform_5, window_bounds = array<i64: 1, 128>}, {transform_indices = @transform_6, window_bounds = array<i64: 1, 16, 128>}]} {
    %c0 = arith.constant 0 : index
    %c0_0 = arith.constant 0 : index
    %c0_1 = arith.constant 0 : index
    %0 = vector.load %arg1[%c0, %c0_0, %c0_1] : memref<1x16x16xbf16, #tpu.memory_space<vmem>>, vector<1x16x16xbf16>
    %1 = vector.shape_cast %0 : vector<1x16x16xbf16> to vector<16x16xbf16>
    %c0_2 = arith.constant 0 : index
    %c0_3 = arith.constant 0 : index
    %c0_4 = arith.constant 0 : index
    %2 = vector.load %arg2[%c0_2, %c0_3, %c0_4] : memref<1x16x128xf32, #tpu.memory_space<vmem>>, vector<1x16x128xf32>
    %3 = vector.shape_cast %2 : vector<1x16x128xf32> to vector<16x128xf32>
    %4 = arith.truncf %3 : vector<16x128xf32> to vector<16x128xbf16>
    %cst = arith.constant dense<0.000000e+00> : vector<16x128xf32>
    %5 = tpu.matmul %1, %4, %cst {dimension_numbers = #tpu.dot_dimension_numbers<[1], [0], [0], [1], [0, 0, 1, 1], [], []>} : vector<16x16xbf16>, vector<16x128xbf16>, vector<16x128xf32> -> vector<16x128xf32>
    %6 = arith.truncf %5 : vector<16x128xf32> to vector<16x128xbf16>
    %7 = tpu.concatenate %6, %4 in 1 : vector<16x128xbf16>, vector<16x128xbf16> -> vector<16x256xbf16>
    %c0_5 = arith.constant 0 : index
    %c0_6 = arith.constant 0 : index
    %c0_7 = arith.constant 0 : index
    %8 = vector.load %arg3[%c0_5, %c0_6, %c0_7] : memref<5x256x128xbf16, #tpu.memory_space<vmem>>, vector<1x256x128xbf16>
    %9 = vector.shape_cast %8 : vector<1x256x128xbf16> to vector<256x128xbf16>
    %cst_8 = arith.constant dense<0.000000e+00> : vector<16x128xf32>
    %10 = tpu.matmul %7, %9, %cst_8 {dimension_numbers = #tpu.dot_dimension_numbers<[1], [0], [0], [1], [0, 0, 1, 1], [], []>} : vector<16x256xbf16>, vector<256x128xbf16>, vector<16x128xf32> -> vector<16x128xf32>
    %c0_9 = arith.constant 0 : index
    %c0_10 = arith.constant 0 : index
    %c0_11 = arith.constant 0 : index
    %11 = vector.load %arg4[%c0_9, %c0_10, %c0_11] : memref<5x1x128xf32, #tpu.memory_space<vmem>>, vector<1x1x128xf32>
    %12 = vector.shape_cast %11 : vector<1x1x128xf32> to vector<1x128xf32>
    %13 = vector.broadcast %12 : vector<1x128xf32> to vector<16x128xf32>
    %14 = arith.addf %10, %13 : vector<16x128xf32>
    %15 = arith.addf %3, %14 : vector<16x128xf32>
    %cst_12 = arith.constant 0.000000e+00 : f32
    %16 = vector.broadcast %cst_12 : f32 to vector<16x128xf32>
    %17 = arith.maximumf %15, %16 : vector<16x128xf32>
    %18 = arith.truncf %17 : vector<16x128xf32> to vector<16x128xbf16>
    %cst_13 = arith.constant dense<0.000000e+00> : vector<16x128xf32>
    %19 = tpu.matmul %1, %18, %cst_13 {dimension_numbers = #tpu.dot_dimension_numbers<[1], [0], [0], [1], [0, 0, 1, 1], [], []>} : vector<16x16xbf16>, vector<16x128xbf16>, vector<16x128xf32> -> vector<16x128xf32>
    %20 = arith.truncf %19 : vector<16x128xf32> to vector<16x128xbf16>
    %21 = tpu.concatenate %20, %18 in 1 : vector<16x128xbf16>, vector<16x128xbf16> -> vector<16x256xbf16>
    %c1 = arith.constant 1 : index
    %c0_14 = arith.constant 0 : index
    %c0_15 = arith.constant 0 : index
    %22 = vector.load %arg3[%c1, %c0_14, %c0_15] : memref<5x256x128xbf16, #tpu.memory_space<vmem>>, vector<1x256x128xbf16>
    %23 = vector.shape_cast %22 : vector<1x256x128xbf16> to vector<256x128xbf16>
    %cst_16 = arith.constant dense<0.000000e+00> : vector<16x128xf32>
    %24 = tpu.matmul %21, %23, %cst_16 {dimension_numbers = #tpu.dot_dimension_numbers<[1], [0], [0], [1], [0, 0, 1, 1], [], []>} : vector<16x256xbf16>, vector<256x128xbf16>, vector<16x128xf32> -> vector<16x128xf32>
    %c1_17 = arith.constant 1 : index
    %c0_18 = arith.constant 0 : index
    %c0_19 = arith.constant 0 : index
    %25 = vector.load %arg4[%c1_17, %c0_18, %c0_19] : memref<5x1x128xf32, #tpu.memory_space<vmem>>, vector<1x1x128xf32>
    %26 = vector.shape_cast %25 : vector<1x1x128xf32> to vector<1x128xf32>
    %27 = vector.broadcast %26 : vector<1x128xf32> to vector<16x128xf32>
    %28 = arith.addf %24, %27 : vector<16x128xf32>
    %29 = arith.addf %17, %28 : vector<16x128xf32>
    %cst_20 = arith.constant 0.000000e+00 : f32
    %30 = vector.broadcast %cst_20 : f32 to vector<16x128xf32>
    %31 = arith.maximumf %29, %30 : vector<16x128xf32>
    %32 = arith.truncf %31 : vector<16x128xf32> to vector<16x128xbf16>
    %cst_21 = arith.constant dense<0.000000e+00> : vector<16x128xf32>
    %33 = tpu.matmul %1, %32, %cst_21 {dimension_numbers = #tpu.dot_dimension_numbers<[1], [0], [0], [1], [0, 0, 1, 1], [], []>} : vector<16x16xbf16>, vector<16x128xbf16>, vector<16x128xf32> -> vector<16x128xf32>
    %34 = arith.truncf %33 : vector<16x128xf32> to vector<16x128xbf16>
    %35 = tpu.concatenate %34, %32 in 1 : vector<16x128xbf16>, vector<16x128xbf16> -> vector<16x256xbf16>
    %c2 = arith.constant 2 : index
    %c0_22 = arith.constant 0 : index
    %c0_23 = arith.constant 0 : index
    %36 = vector.load %arg3[%c2, %c0_22, %c0_23] : memref<5x256x128xbf16, #tpu.memory_space<vmem>>, vector<1x256x128xbf16>
    %37 = vector.shape_cast %36 : vector<1x256x128xbf16> to vector<256x128xbf16>
    %cst_24 = arith.constant dense<0.000000e+00> : vector<16x128xf32>
    %38 = tpu.matmul %35, %37, %cst_24 {dimension_numbers = #tpu.dot_dimension_numbers<[1], [0], [0], [1], [0, 0, 1, 1], [], []>} : vector<16x256xbf16>, vector<256x128xbf16>, vector<16x128xf32> -> vector<16x128xf32>
    %c2_25 = arith.constant 2 : index
    %c0_26 = arith.constant 0 : index
    %c0_27 = arith.constant 0 : index
    %39 = vector.load %arg4[%c2_25, %c0_26, %c0_27] : memref<5x1x128xf32, #tpu.memory_space<vmem>>, vector<1x1x128xf32>
    %40 = vector.shape_cast %39 : vector<1x1x128xf32> to vector<1x128xf32>
    %41 = vector.broadcast %40 : vector<1x128xf32> to vector<16x128xf32>
    %42 = arith.addf %38, %41 : vector<16x128xf32>
    %43 = arith.addf %31, %42 : vector<16x128xf32>
    %cst_28 = arith.constant 0.000000e+00 : f32
    %44 = vector.broadcast %cst_28 : f32 to vector<16x128xf32>
    %45 = arith.maximumf %43, %44 : vector<16x128xf32>
    %46 = arith.truncf %45 : vector<16x128xf32> to vector<16x128xbf16>
    %cst_29 = arith.constant dense<0.000000e+00> : vector<16x128xf32>
    %47 = tpu.matmul %1, %46, %cst_29 {dimension_numbers = #tpu.dot_dimension_numbers<[1], [0], [0], [1], [0, 0, 1, 1], [], []>} : vector<16x16xbf16>, vector<16x128xbf16>, vector<16x128xf32> -> vector<16x128xf32>
    %48 = arith.truncf %47 : vector<16x128xf32> to vector<16x128xbf16>
    %49 = tpu.concatenate %48, %46 in 1 : vector<16x128xbf16>, vector<16x128xbf16> -> vector<16x256xbf16>
    %c3 = arith.constant 3 : index
    %c0_30 = arith.constant 0 : index
    %c0_31 = arith.constant 0 : index
    %50 = vector.load %arg3[%c3, %c0_30, %c0_31] : memref<5x256x128xbf16, #tpu.memory_space<vmem>>, vector<1x256x128xbf16>
    %51 = vector.shape_cast %50 : vector<1x256x128xbf16> to vector<256x128xbf16>
    %cst_32 = arith.constant dense<0.000000e+00> : vector<16x128xf32>
    %52 = tpu.matmul %49, %51, %cst_32 {dimension_numbers = #tpu.dot_dimension_numbers<[1], [0], [0], [1], [0, 0, 1, 1], [], []>} : vector<16x256xbf16>, vector<256x128xbf16>, vector<16x128xf32> -> vector<16x128xf32>
    %c3_33 = arith.constant 3 : index
    %c0_34 = arith.constant 0 : index
    %c0_35 = arith.constant 0 : index
    %53 = vector.load %arg4[%c3_33, %c0_34, %c0_35] : memref<5x1x128xf32, #tpu.memory_space<vmem>>, vector<1x1x128xf32>
    %54 = vector.shape_cast %53 : vector<1x1x128xf32> to vector<1x128xf32>
    %55 = vector.broadcast %54 : vector<1x128xf32> to vector<16x128xf32>
    %56 = arith.addf %52, %55 : vector<16x128xf32>
    %57 = arith.addf %45, %56 : vector<16x128xf32>
    %cst_36 = arith.constant 0.000000e+00 : f32
    %58 = vector.broadcast %cst_36 : f32 to vector<16x128xf32>
    %59 = arith.maximumf %57, %58 : vector<16x128xf32>
    %60 = arith.truncf %59 : vector<16x128xf32> to vector<16x128xbf16>
    %cst_37 = arith.constant dense<0.000000e+00> : vector<16x128xf32>
    %61 = tpu.matmul %1, %60, %cst_37 {dimension_numbers = #tpu.dot_dimension_numbers<[1], [0], [0], [1], [0, 0, 1, 1], [], []>} : vector<16x16xbf16>, vector<16x128xbf16>, vector<16x128xf32> -> vector<16x128xf32>
    %62 = arith.truncf %61 : vector<16x128xf32> to vector<16x128xbf16>
    %63 = tpu.concatenate %62, %60 in 1 : vector<16x128xbf16>, vector<16x128xbf16> -> vector<16x256xbf16>
    %c4 = arith.constant 4 : index
    %c0_38 = arith.constant 0 : index
    %c0_39 = arith.constant 0 : index
    %64 = vector.load %arg3[%c4, %c0_38, %c0_39] : memref<5x256x128xbf16, #tpu.memory_space<vmem>>, vector<1x256x128xbf16>
    %65 = vector.shape_cast %64 : vector<1x256x128xbf16> to vector<256x128xbf16>
    %cst_40 = arith.constant dense<0.000000e+00> : vector<16x128xf32>
    %66 = tpu.matmul %63, %65, %cst_40 {dimension_numbers = #tpu.dot_dimension_numbers<[1], [0], [0], [1], [0, 0, 1, 1], [], []>} : vector<16x256xbf16>, vector<256x128xbf16>, vector<16x128xf32> -> vector<16x128xf32>
    %c4_41 = arith.constant 4 : index
    %c0_42 = arith.constant 0 : index
    %c0_43 = arith.constant 0 : index
    %67 = vector.load %arg4[%c4_41, %c0_42, %c0_43] : memref<5x1x128xf32, #tpu.memory_space<vmem>>, vector<1x1x128xf32>
    %68 = vector.shape_cast %67 : vector<1x1x128xf32> to vector<1x128xf32>
    %69 = vector.broadcast %68 : vector<1x128xf32> to vector<16x128xf32>
    %70 = arith.addf %66, %69 : vector<16x128xf32>
    %71 = arith.addf %59, %70 : vector<16x128xf32>
    %72 = arith.truncf %71 : vector<16x128xf32> to vector<16x128xbf16>
    %c0_44 = arith.constant 0 : index
    %c0_45 = arith.constant 0 : index
    %73 = vector.load %arg5[%c0_44, %c0_45] : memref<128x128xbf16, #tpu.memory_space<vmem>>, vector<128x128xbf16>
    %cst_46 = arith.constant dense<0.000000e+00> : vector<16x128xf32>
    %74 = tpu.matmul %72, %73, %cst_46 {dimension_numbers = #tpu.dot_dimension_numbers<[1], [0], [0], [1], [0, 0, 1, 1], [], []>} : vector<16x128xbf16>, vector<128x128xbf16>, vector<16x128xf32> -> vector<16x128xf32>
    %c0_47 = arith.constant 0 : index
    %c0_48 = arith.constant 0 : index
    %75 = vector.load %arg6[%c0_47, %c0_48] : memref<1x128xf32, #tpu.memory_space<vmem>>, vector<1x128xf32>
    %76 = vector.broadcast %75 : vector<1x128xf32> to vector<16x128xf32>
    %77 = arith.addf %74, %76 : vector<16x128xf32>
    %c0_49 = arith.constant 0 : index
    %c0_50 = arith.constant 0 : index
    %c0_51 = arith.constant 0 : index
    %78 = vector.load %arg7[%c0_49, %c0_50, %c0_51] : memref<1x16x128xf32, #tpu.memory_space<vmem>>, vector<1x16x128xf32>
    %79 = vector.shape_cast %78 : vector<1x16x128xf32> to vector<16x128xf32>
    %80 = vector.shape_cast %77 : vector<16x128xf32> to vector<1x16x128xf32>
    tpu.vector_store %arg7[%c0_49, %c0_50, %c0_51], %80 {strides = array<i32>} : memref<1x16x128xf32, #tpu.memory_space<vmem>>, vector<1x16x128xf32>,
    return
  }
  func.func @transform_0(%arg0: i32) -> (i32, i32, i32) {
    %c0_i32 = arith.constant 0 : i32
    %c0_i32_0 = arith.constant 0 : i32
    %c0_i32_1 = arith.constant 0 : i32
    return %arg0, %c0_i32, %c0_i32_0 : i32, i32, i32
  }
  func.func @transform_1(%arg0: i32) -> (i32, i32, i32) {
    %c0_i32 = arith.constant 0 : i32
    %c0_i32_0 = arith.constant 0 : i32
    %c0_i32_1 = arith.constant 0 : i32
    return %arg0, %c0_i32, %c0_i32_0 : i32, i32, i32
  }
  func.func @transform_2(%arg0: i32) -> (i32, i32, i32) {
    %c0_i32 = arith.constant 0 : i32
    %c0_i32_0 = arith.constant 0 : i32
    %c0_i32_1 = arith.constant 0 : i32
    %c0_i32_2 = arith.constant 0 : i32
    return %c0_i32, %c0_i32_0, %c0_i32_1 : i32, i32, i32
  }
  func.func @transform_3(%arg0: i32) -> (i32, i32, i32) {
    %c0_i32 = arith.constant 0 : i32
    %c0_i32_0 = arith.constant 0 : i32
    %c0_i32_1 = arith.constant 0 : i32
    %c0_i32_2 = arith.constant 0 : i32
    return %c0_i32, %c0_i32_0, %c0_i32_1 : i32, i32, i32
  }
  func.func @transform_4(%arg0: i32) -> (i32, i32) {
    %c0_i32 = arith.constant 0 : i32
    %c0_i32_0 = arith.constant 0 : i32
    %c0_i32_1 = arith.constant 0 : i32
    return %c0_i32, %c0_i32_0 : i32, i32
  }
  func.func @transform_5(%arg0: i32) -> (i32, i32) {
    %c0_i32 = arith.constant 0 : i32
    %c0_i32_0 = arith.constant 0 : i32
    %c0_i32_1 = arith.constant 0 : i32
    return %c0_i32, %c0_i32_0 : i32, i32
  }
  func.func @transform_6(%arg0: i32) -> (i32, i32, i32) {
    %c0_i32 = arith.constant 0 : i32
    %c0_i32_0 = arith.constant 0 : i32
    %c0_i32_1 = arith.constant 0 : i32
    return %arg0, %c0_i32, %c0_i32_0 : i32, i32, i32
  }
}

</mosaic_0001>

<llo_original>
// kernel: tpu_custom_call.1
$region0: #{tpu_custom_call.1}
  #allocation0 [shape = 'u32[]', space=smem, size = 0x4, offset = 0x4, fixed_abs, tag = 'smem constant byte address 0x4 - core index']
  #allocation1 [shape = 'u32[144,128]{1,0:T(1,128)}', space=vmem, size = 0x12000, scoped, tag = 'internal scratch']
  %s0 = inlined_call_operand.hbm [shape: bf16[4,16,16], index: 0, kind: input, shape index: {}]
  %s1 = inlined_call_operand.hbm [shape: f32[4,16,128], index: 1, kind: input, shape index: {}]
  %s2 = inlined_call_operand.hbm [shape: bf16[5,256,128], index: 2, kind: input, shape index: {}]
  %s3 = inlined_call_operand.vmem [shape: f32[5,1,128], index: 3, kind: input, shape index: {}]
  %s4 = inlined_call_operand.hbm [shape: bf16[128,128], index: 4, kind: input, shape index: {}]
  %s5 = inlined_call_operand.vmem [shape: f32[1,128], index: 5, kind: input, shape index: {}]
  %s6 = inlined_call_operand.hbm [shape: f32[4,16,128], index: 6, kind: output, shape index: {}]
  %s7 = sld [smem:[#allocation0]]
  $region73: #{tpu_custom_call.1} parent=0
    _
  %s9 = ssub.s32 1, %s7
  %s10 = scalar_select 0, %s9, %s7
  $region1: #{tpu_custom_call.1} parent=0
    #allocation2 [shape = 'u8[8192]{0}', space=vmem, size = 0x2000, scoped, tag = 'input window, operand 0']
    #allocation3 [shape = 's32[2]{0}', space=sflag, size = 0x8, scoped, tag = 'scoped memory for tpu_custom_call.1']
    #allocation4 [shape = 's32[2]{0}', space=sflag, size = 0x8, scoped, tag = 'scoped memory for tpu_custom_call.1']
    #allocation5 [shape = 'u8[16384]{0}', space=vmem, size = 0x4000, scoped, tag = 'input window, operand 1']
    #allocation6 [shape = 's32[2]{0}', space=sflag, size = 0x8, scoped, tag = 'scoped memory for tpu_custom_call.1']
    #allocation7 [shape = 'u8[327680]{0}', space=vmem, size = 0x50000, scoped, tag = 'input window, operand 2, single buffered']
    #allocation8 [shape = 'u8[32768]{0}', space=vmem, size = 0x8000, scoped, tag = 'input window, operand 4, single buffered']
    #allocation9 [shape = 's32[1]{0}', space=sflag, size = 0x4, scoped, tag = 'scoped memory for tpu_custom_call.1']
    #allocation10 [shape = 'u8[16384]{0}', space=vmem, size = 0x4000, scoped, tag = 'output window, operand 0']
    %11 = vsyncpa [#allocation3], 0
    %s12 = scalar_lea.sflag [#allocation3], 1
    %13 = vsyncpa %s12, 0
    %14 = vsyncpa [#allocation6], 0
    %s15 = scalar_lea.sflag [#allocation6], 1
    %16 = vsyncpa %s15, 0
    %17 = vsyncpa [#allocation9], 0
    %18 = vsyncpa [#allocation4], 0
    %s19 = scalar_lea.sflag [#allocation4], 1
    %20 = vsyncpa %s19, 0
    loop: start=0, step=1, limit=6
    $region2: #{tpu_custom_call.1} parent=1 // loop_pre_header
      _
    $region3: #{tpu_custom_call.1} parent=1 // loop_header
      %s22 = sphi 0, %s26
      %p23 = scmp.ge.s32.totalorder %s22, 6
      %s32 = sphi 0, %s34
      %s35 = sphi 0, %s32
      %s36 = sphi 0, %s35
      %s52 = sphi 0, %s36
      %s58 = sphi 0, %s60
      %s61 = sphi 0, %s58
      %s62 = sphi 0, %s61
      %s78 = sphi 0, %s62
      %s82 = sphi 0, %s82
      %s84 = sphi 0, %s82
      %s85 = sphi 0, %s84
      %s99 = sphi 0, %s85
      %s103 = sphi 0, %s103
      %s105 = sphi 0, %s103
      %s106 = sphi 0, %s105
      %s120 = sphi 0, %s106
      %s124 = sphi 0, %s124
      %s126 = sphi 0, %s124
      %s127 = sphi 0, %s126
      %s141 = sphi 0, %s127
      %s145 = sphi 0, %s145
      %s147 = sphi 0, %s145
      %s148 = sphi 0, %s147
      %s162 = sphi 0, %s148
      %s168 = sphi 0, %s170
      %s171 = sphi 0, %s168
      %s172 = sphi 0, %s171
      %s188 = sphi 0, %s172
    $region4: #{tpu_custom_call.1} parent=1 // loop_header_branch
      %25 = sbr.rel (%p23) target = $region8
    $region5: #{tpu_custom_call.1} parent=1 // loop_body
      %s27 = ssub.s32 %s22, 1
      %s28 = ssub.s32 %s22, 2
      %s29 = sadd.s32 %s22, 1
      %s30 = ssub.s32 %s22, %s29
      %p31 = scmp.eq.s32.totalorder %s30, 0
      %s33 = sadd.s32 %s32, 1
      %s34 = scalar_select %p31, %s32, %s33
      %p37 = pneg %p31
      %p38 = scmp.eq.s32.totalorder %s22, 3
      %p39 = por %p37, %p38
      %p40 = scmp.ne.s32.totalorder %s32, %s35
      %p41 = scmp.eq.s32.totalorder %s22, 0
      %p42 = por %p40, %p41
      %p43 = scmp.ne.s32.totalorder %s32, %s35
      %p44 = scmp.eq.s32.totalorder %s27, 3
      %p45 = por %p43, %p44
      %p46 = scmp.ne.s32.totalorder %s35, %s36
      %p47 = scmp.eq.s32.totalorder %s27, 0
      %p48 = por %p46, %p47
      %p49 = scmp.ne.s32.totalorder %s35, %s36
      %p50 = scmp.eq.s32.totalorder %s28, 3
      %p51 = por %p49, %p50
      %p53 = scmp.ne.s32.totalorder %s36, %s52
      %p54 = scmp.eq.s32.totalorder %s28, 0
      %p55 = por %p53, %p54
      %s56 = ssub.s32 %s22, %s29
      %p57 = scmp.eq.s32.totalorder %s56, 0
      %s59 = sadd.s32 %s58, 1
      %s60 = scalar_select %p57, %s58, %s59
      %p63 = pneg %p57
      %p64 = scmp.eq.s32.totalorder %s22, 3
      %p65 = por %p63, %p64
      %p66 = scmp.ne.s32.totalorder %s58, %s61
      %p67 = scmp.eq.s32.totalorder %s22, 0
      %p68 = por %p66, %p67
      %p69 = scmp.ne.s32.totalorder %s58, %s61
      %p70 = scmp.eq.s32.totalorder %s27, 3
      %p71 = por %p69, %p70
      %p72 = scmp.ne.s32.totalorder %s61, %s62
      %p73 = scmp.eq.s32.totalorder %s27, 0
      %p74 = por %p72, %p73
      %p75 = scmp.ne.s32.totalorder %s61, %s62
      %p76 = scmp.eq.s32.totalorder %s28, 3
      %p77 = por %p75, %p76
      %p79 = scmp.ne.s32.totalorder %s62, %s78
      %p80 = scmp.eq.s32.totalorder %s28, 0
      %p81 = por %p79, %p80
      %s83 = sadd.s32 %s82, 1
      %p86 = scmp.eq.s32.totalorder %s22, 3
      %p87 = scmp.ne.s32.totalorder %s82, %s84
      %p88 = scmp.eq.s32.totalorder %s22, 0
      %p89 = por %p87, %p88
      %p90 = scmp.ne.s32.totalorder %s82, %s84
      %p91 = scmp.eq.s32.totalorder %s27, 3
      %p92 = por %p90, %p91
      %p93 = scmp.ne.s32.totalorder %s84, %s85
      %p94 = scmp.eq.s32.totalorder %s27, 0
      %p95 = por %p93, %p94
      %p96 = scmp.ne.s32.totalorder %s84, %s85
      %p97 = scmp.eq.s32.totalorder %s28, 3
      %p98 = por %p96, %p97
      %p100 = scmp.ne.s32.totalorder %s85, %s99
      %p101 = scmp.eq.s32.totalorder %s28, 0
      %p102 = por %p100, %p101
      %s104 = sadd.s32 %s103, 1
      %p107 = scmp.eq.s32.totalorder %s22, 3
      %p108 = scmp.ne.s32.totalorder %s103, %s105
      %p109 = scmp.eq.s32.totalorder %s22, 0
      %p110 = por %p108, %p109
      %p111 = scmp.ne.s32.totalorder %s103, %s105
      %p112 = scmp.eq.s32.totalorder %s27, 3
      %p113 = por %p111, %p112
      %p114 = scmp.ne.s32.totalorder %s105, %s106
      %p115 = scmp.eq.s32.totalorder %s27, 0
      %p116 = por %p114, %p115
      %p117 = scmp.ne.s32.totalorder %s105, %s106
      %p118 = scmp.eq.s32.totalorder %s28, 3
      %p119 = por %p117, %p118
      %p121 = scmp.ne.s32.totalorder %s106, %s120
      %p122 = scmp.eq.s32.totalorder %s28, 0
      %p123 = por %p121, %p122
      %s125 = sadd.s32 %s124, 1
      %p128 = scmp.eq.s32.totalorder %s22, 3
      %p129 = scmp.ne.s32.totalorder %s124, %s126
      %p130 = scmp.eq.s32.totalorder %s22, 0
      %p131 = por %p129, %p130
      %p132 = scmp.ne.s32.totalorder %s124, %s126
      %p133 = scmp.eq.s32.totalorder %s27, 3
      %p134 = por %p132, %p133
      %p135 = scmp.ne.s32.totalorder %s126, %s127
      %p136 = scmp.eq.s32.totalorder %s27, 0
      %p137 = por %p135, %p136
      %p138 = scmp.ne.s32.totalorder %s126, %s127
      %p139 = scmp.eq.s32.totalorder %s28, 3
      %p140 = por %p138, %p139
      %p142 = scmp.ne.s32.totalorder %s127, %s141
      %p143 = scmp.eq.s32.totalorder %s28, 0
      %p144 = por %p142, %p143
      %s146 = sadd.s32 %s145, 1
      %p149 = scmp.eq.s32.totalorder %s22, 3
      %p150 = scmp.ne.s32.totalorder %s145, %s147
      %p151 = scmp.eq.s32.totalorder %s22, 0
      %p152 = por %p150, %p151
      %p153 = scmp.ne.s32.totalorder %s145, %s147
      %p154 = scmp.eq.s32.totalorder %s27, 3
      %p155 = por %p153, %p154
      %p156 = scmp.ne.s32.totalorder %s147, %s148
      %p157 = scmp.eq.s32.totalorder %s27, 0
      %p158 = por %p156, %p157
      %p159 = scmp.ne.s32.totalorder %s147, %s148
      %p160 = scmp.eq.s32.totalorder %s28, 3
      %p161 = por %p159, %p160
      %p163 = scmp.ne.s32.totalorder %s148, %s162
      %p164 = scmp.eq.s32.totalorder %s28, 0
      %p165 = por %p163, %p164
      %s166 = ssub.s32 %s22, %s29
      %p167 = scmp.eq.s32.totalorder %s166, 0
      %s169 = sadd.s32 %s168, 1
      %s170 = scalar_select %p167, %s168, %s169
      %p173 = pneg %p167
      %p174 = scmp.eq.s32.totalorder %s22, 3
      %p175 = por %p173, %p174
      %p176 = scmp.ne.s32.totalorder %s168, %s171
      %p177 = scmp.eq.s32.totalorder %s22, 0
      %p178 = por %p176, %p177
      %p179 = scmp.ne.s32.totalorder %s168, %s171
      %p180 = scmp.eq.s32.totalorder %s27, 3
      %p181 = por %p179, %p180
      %p182 = scmp.ne.s32.totalorder %s171, %s172
      %p183 = scmp.eq.s32.totalorder %s27, 0
      %p184 = por %p182, %p183
      %p185 = scmp.ne.s32.totalorder %s171, %s172
      %p186 = scmp.eq.s32.totalorder %s28, 3
      %p187 = por %p185, %p186
      %p189 = scmp.ne.s32.totalorder %s172, %s188
      %p190 = scmp.eq.s32.totalorder %s28, 0
      %p191 = por %p189, %p190
      %p192 = scmp.le.s32.totalorder 1, %s22
      %p193 = scmp.lt.s32.totalorder %s22, 5
      %p194 = pnand %p192, %p193
      %p195 = pneg %p194
      // Predicated region
      $region9: #{tpu_custom_call.1} parent=5 // pred_check
        _
      $region10: #{tpu_custom_call.1} parent=5 // pred_check_branch
        %197 = sbr.rel (%p194) target = $region12
      $region11: #{tpu_custom_call.1} parent=5 // pred_region
        %s198 = ssub.s32 %s22, 1
        // Predicated region
        $region13: #{tpu_custom_call.1} parent=11 // pred_check
          %p199 = pneg %p95
        $region14: #{tpu_custom_call.1} parent=11 // pred_check_branch
          %201 = sbr.rel (%p199) target = $region16
        $region15: #{tpu_custom_call.1} parent=11 // pred_region
          %s203 = ssub.s32 10240, 10240
          %204 = vsyncadd [#allocation6], %s203
          %s205 = sshll.u32 [#allocation7], 4
          %s206 = int_to_ptr.vmem [resolvable:$true] %s205
          %211 = dma.hbm_to_vmem [thread:$0]  %s2, 10240, %s206, [#allocation6], 64, 64, 4
        $region16: #{tpu_custom_call.1} parent=11 // pred_fallthru
          _
        // Predicated region
        $region17: #{tpu_custom_call.1} parent=11 // pred_check
          %p212 = pneg %p116
        $region18: #{tpu_custom_call.1} parent=11 // pred_check_branch
          %214 = sbr.rel (%p212) target = $region20
        $region19: #{tpu_custom_call.1} parent=11 // pred_region
          _
        $region20: #{tpu_custom_call.1} parent=11 // pred_fallthru
          _
        // Predicated region
        $region21: #{tpu_custom_call.1} parent=11 // pred_check
          %p215 = pneg %p137
        $region22: #{tpu_custom_call.1} parent=11 // pred_check_branch
          %217 = sbr.rel (%p215) target = $region24
        $region23: #{tpu_custom_call.1} parent=11 // pred_region
          %s219 = ssub.s32 1024, 1024
          %220 = vsyncadd [#allocation9], %s219
          %s221 = sshll.u32 [#allocation8], 4
          %s222 = int_to_ptr.vmem [resolvable:$true] %s221
          %227 = dma.hbm_to_vmem [thread:$0]  %s4, 1024, %s222, [#allocation9], 64, 64, 4
        $region24: #{tpu_custom_call.1} parent=11 // pred_fallthru
          _
        // Predicated region
        $region25: #{tpu_custom_call.1} parent=11 // pred_check
          %p228 = pneg %p158
        $region26: #{tpu_custom_call.1} parent=11 // pred_check_branch
          %230 = sbr.rel (%p228) target = $region28
        $region27: #{tpu_custom_call.1} parent=11 // pred_region
          _
        $region28: #{tpu_custom_call.1} parent=11 // pred_fallthru
          _
      $region12: #{tpu_custom_call.1} parent=5 // pred_fallthru
        _
      %p231 = scmp.lt.s32.totalorder %s22, 4
      // Predicated region
      $region29: #{tpu_custom_call.1} parent=5 // pred_check
        %p232 = pneg %p231
      $region30: #{tpu_custom_call.1} parent=5 // pred_check_branch
        %234 = sbr.rel (%p232) target = $region32
      $region31: #{tpu_custom_call.1} parent=5 // pred_region
        // Predicated region
        $region33: #{tpu_custom_call.1} parent=31 // pred_check
          %p235 = pneg %p42
        $region34: #{tpu_custom_call.1} parent=31 // pred_check_branch
          %237 = sbr.rel (%p235) target = $region36
        $region35: #{tpu_custom_call.1} parent=31 // pred_region
          %s238 = sand.u32 %s32, 1
          %s239 = scalar_lea.sflag [#allocation3], %s238
          %s240 = sand.u32 %s32, 1
          %s241 = smul.addr %s240, 8
          %s242 = scalar_lea.vmem [#allocation2], %s241
          %s244 = ssub.s32 128, 128
          %245 = vsyncadd %s239, %s244
          %s246 = smul.addr %s22, 2
          %s247 = smul.addr %s246, 64
          %s248 = scalar_lea.hbm %s0, %s247
          %s249 = sshll.u32 %s242, 4
          %s250 = int_to_ptr.vmem [resolvable:$true] %s249
          %255 = dma.hbm_to_vmem [thread:$0]  %s248, 128, %s250, %s239, 64, 64, 4
        $region36: #{tpu_custom_call.1} parent=31 // pred_fallthru
          _
        // Predicated region
        $region37: #{tpu_custom_call.1} parent=31 // pred_check
          %p256 = pneg %p68
        $region38: #{tpu_custom_call.1} parent=31 // pred_check_branch
          %258 = sbr.rel (%p256) target = $region40
        $region39: #{tpu_custom_call.1} parent=31 // pred_region
          %s259 = sand.u32 %s22, 1
          %s260 = scalar_lea.sflag [#allocation6], %s259
          %s261 = sand.u32 %s58, 1
          %s262 = smul.addr %s261, 16
          %s263 = scalar_lea.vmem [#allocation5], %s262
          %s265 = ssub.s32 256, 256
          %266 = vsyncadd %s260, %s265
          %s267 = smul.addr %s22, 2
          %s268 = smul.addr %s267, 128
          %s269 = scalar_lea.hbm %s1, %s268
          %s270 = sshll.u32 %s263, 4
          %s271 = int_to_ptr.vmem [resolvable:$true] %s270
          %276 = dma.hbm_to_vmem [thread:$0]  %s269, 256, %s271, %s260, 128, 128, 8
        $region40: #{tpu_custom_call.1} parent=31 // pred_fallthru
          _
      $region32: #{tpu_custom_call.1} parent=5 // pred_fallthru
        _
      %p277 = scmp.le.s32.totalorder 1, %s22
      %p278 = scmp.lt.s32.totalorder %s22, 5
      %p279 = pnand %p277, %p278
      %p280 = pneg %p279
      // Predicated region
      $region41: #{tpu_custom_call.1} parent=5 // pred_check
        _
      $region42: #{tpu_custom_call.1} parent=5 // pred_check_branch
        %282 = sbr.rel (%p279) target = $region44
      $region43: #{tpu_custom_call.1} parent=5 // pred_region
        %s283 = ssub.s32 %s22, 1
        %s284 = sand.u32 %s35, 1
        %s285 = scalar_lea.sflag [#allocation3], %s284
        %s286 = sand.u32 %s35, 1
        %s287 = smul.addr %s286, 8
        %s288 = scalar_lea.vmem [#allocation2], %s287
        // Predicated region
        $region45: #{tpu_custom_call.1} parent=43 // pred_check
          %p289 = pneg %p48
        $region46: #{tpu_custom_call.1} parent=43 // pred_check_branch
          %291 = sbr.rel (%p289) target = $region48
        $region47: #{tpu_custom_call.1} parent=43 // pred_region
          %292 = dma.done %s285, 128
        $region48: #{tpu_custom_call.1} parent=43 // pred_fallthru
          _
        %s293 = sand.u32 %s27, 1
        %s294 = scalar_lea.sflag [#allocation6], %s293
        %s295 = sand.u32 %s61, 1
        %s296 = smul.addr %s295, 16
        %s297 = scalar_lea.vmem [#allocation5], %s296
        // Predicated region
        $region49: #{tpu_custom_call.1} parent=43 // pred_check
          %p298 = pneg %p74
        $region50: #{tpu_custom_call.1} parent=43 // pred_check_branch
          %300 = sbr.rel (%p298) target = $region52
        $region51: #{tpu_custom_call.1} parent=43 // pred_region
          %301 = dma.done %s294, 256
        $region52: #{tpu_custom_call.1} parent=43 // pred_fallthru
          _
        // Predicated region
        $region53: #{tpu_custom_call.1} parent=43 // pred_check
          %p302 = pneg %p95
        $region54: #{tpu_custom_call.1} parent=43 // pred_check_branch
          %304 = sbr.rel (%p302) target = $region56
        $region55: #{tpu_custom_call.1} parent=43 // pred_region
          %305 = dma.done [#allocation6], 10240
        $region56: #{tpu_custom_call.1} parent=43 // pred_fallthru
          _
        // Predicated region
        $region57: #{tpu_custom_call.1} parent=43 // pred_check
          %p306 = pneg %p137
        $region58: #{tpu_custom_call.1} parent=43 // pred_check_branch
          %308 = sbr.rel (%p306) target = $region60
        $region59: #{tpu_custom_call.1} parent=43 // pred_region
          %309 = dma.done [#allocation9], 1024
        $region60: #{tpu_custom_call.1} parent=43 // pred_fallthru
          _
        %s310 = sand.u32 %s35, 1
        %s311 = scalar_lea.sflag [#allocation3], %s310
        %s312 = sand.u32 %s35, 1
        %s313 = smul.addr %s312, 8
        %s314 = scalar_lea.vmem [#allocation2], %s313
        %p315 = pneg %p48
        %p316 = pneg %p45
        %s317 = sand.u32 %s27, 1
        %s318 = scalar_lea.sflag [#allocation6], %s317
        %s319 = sand.u32 %s61, 1
        %s320 = smul.addr %s319, 16
        %s321 = scalar_lea.vmem [#allocation5], %s320
        %p322 = pneg %p74
        %p323 = pneg %p71
        %p324 = pneg %p95
        %p325 = pneg %p92
        %p326 = pneg %p116
        %p327 = pneg %p113
        %p328 = pneg %p137
        %p329 = pneg %p134
        %p330 = pneg %p158
        %p331 = pneg %p155
        %p332 = pneg %p184
        %p333 = pneg %p181
        %s334 = sand.u32 %s171, 1
        %s335 = scalar_lea.sflag [#allocation4], %s334
        %s336 = sand.u32 %s171, 1
        %s337 = smul.addr %s336, 16
        %s338 = scalar_lea.vmem [#allocation10], %s337
        %v340 = vld [vmem:[%s288] sm:$0xf]
        %v341 = vld [vmem:[%s288 + $0x4] sm:$0xf]
        %v342 = vld [vmem:[%s297] sm:$0xff]
        %v343 = vld [vmem:[%s297 + $0x8] sm:$0xff]
        %v344 = vpack.c.bf16 %v343, %v342
        %v347 = vunpack.c.l.b16 %v340
        %v348 = vunpack.c.l.b16 %v341
        %v349 = vpack.c.b16 %v348, %v347
        %vm350 = vcmask 130048
        %v352 = vsel %vm350, %v349, 0
        %354 = vmatprep.subr.bf16.mxu0 0
        %355 = vmatpush1.bf16.msra.mxu0 %v344
        %356 = vmatprep.subr.bf16.mxu0 0
        %357 = vmatpush1.bf16.msra.mxu0 0
        %358 = vmatprep.subr.bf16.mxu0 0
        %359 = vmatpush1.bf16.msra.mxu0 0
        %360 = vmatprep.subr.bf16.mxu0 0
        %361 = vmatpush1.bf16.msra.mxu0 0
        %362 = vmatprep.subr.bf16.mxu0 0
        %363 = vmatpush1.bf16.msra.mxu0 0
        %364 = vmatprep.subr.bf16.mxu0 0
        %365 = vmatpush1.bf16.msra.mxu0 0
        %366 = vmatprep.subr.bf16.mxu0 0
        %367 = vmatpush1.bf16.msra.mxu0 0
        %368 = vmatprep.subr.bf16.mxu0 0
        %369 = vmatpush1.bf16.msra.mxu0 0
        %370 = vmatprep.subr.bf16.mxu0 0
        %371 = vmatpush1.bf16.msra.mxu0 0
        %372 = vmatprep.subr.bf16.mxu0 0
        %373 = vmatpush1.bf16.msra.mxu0 0
        %374 = vmatprep.subr.bf16.mxu0 0
        %375 = vmatpush1.bf16.msra.mxu0 0
        %376 = vmatprep.subr.bf16.mxu0 0
        %377 = vmatpush1.bf16.msra.mxu0 0
        %378 = vmatprep.subr.bf16.mxu0 0
        %379 = vmatpush1.bf16.msra.mxu0 0
        %380 = vmatprep.subr.bf16.mxu0 0
        %381 = vmatpush1.bf16.msra.mxu0 0
        %382 = vmatprep.subr.bf16.mxu0 0
        %383 = vmatpush1.bf16.msra.mxu0 0
        %384 = vmatprep.subr.bf16.mxu0 0
        %385 = vmatpush1.bf16.msra.mxu0 0
        %386 = vmatprep.mubr.bf16.mxu0 0
        %387 = vmatmul.mubr.bf16.gmra.mrb[0].mxu0 %v352
        %v388 = vpop.f32.mrb[0].mxu0
        %v389 = vadd.f32 0.0, %v388
        %v390 = vpop.f32.mrb[0].mxu0
        %v391 = vpop.f32.mrb[0].mxu0
        %v392 = vadd.f32 0.0, %v391
        %v393 = vpop.f32.mrb[0].mxu0
        %394 = vdwg.mxu0
        %v395 = vpack.c.bf16 %v392, %v389
        %v396 = vld [vmem:[#allocation7] sm:$0xf]
        %v397 = vld [vmem:[#allocation7 + $0x4] sm:$0xf]
        %v398 = vld [vmem:[#allocation7 + $0x8] sm:$0xf]
        %v399 = vld [vmem:[#allocation7 + $0xc] sm:$0xf]
        %v400 = vld [vmem:[#allocation7 + $0x10] sm:$0xf]
        %v401 = vld [vmem:[#allocation7 + $0x14] sm:$0xf]
        %v402 = vld [vmem:[#allocation7 + $0x18] sm:$0xf]
        %v403 = vld [vmem:[#allocation7 + $0x1c] sm:$0xf]
        %v404 = vld [vmem:[#allocation7 + $0x20] sm:$0xf]
        %v405 = vld [vmem:[#allocation7 + $0x24] sm:$0xf]
        %v406 = vld [vmem:[#allocation7 + $0x28] sm:$0xf]
        %v407 = vld [vmem:[#allocation7 + $0x2c] sm:$0xf]
        %v408 = vld [vmem:[#allocation7 + $0x30] sm:$0xf]
        %v409 = vld [vmem:[#allocation7 + $0x34] sm:$0xf]
        %v410 = vld [vmem:[#allocation7 + $0x38] sm:$0xf]
        %v411 = vld [vmem:[#allocation7 + $0x3c] sm:$0xf]
        %v412 = vld [vmem:[#allocation7 + $0x40] sm:$0xf]
        %v413 = vld [vmem:[#allocation7 + $0x44] sm:$0xf]
        %v414 = vld [vmem:[#allocation7 + $0x48] sm:$0xf]
        %v415 = vld [vmem:[#allocation7 + $0x4c] sm:$0xf]
        %v416 = vld [vmem:[#allocation7 + $0x50] sm:$0xf]
        %v417 = vld [vmem:[#allocation7 + $0x54] sm:$0xf]
        %v418 = vld [vmem:[#allocation7 + $0x58] sm:$0xf]
        %v419 = vld [vmem:[#allocation7 + $0x5c] sm:$0xf]
        %v420 = vld [vmem:[#allocation7 + $0x60] sm:$0xf]
        %v421 = vld [vmem:[#allocation7 + $0x64] sm:$0xf]
        %v422 = vld [vmem:[#allocation7 + $0x68] sm:$0xf]
        %v423 = vld [vmem:[#allocation7 + $0x6c] sm:$0xf]
        %v424 = vld [vmem:[#allocation7 + $0x70] sm:$0xf]
        %v425 = vld [vmem:[#allocation7 + $0x74] sm:$0xf]
        %v426 = vld [vmem:[#allocation7 + $0x78] sm:$0xf]
        %v427 = vld [vmem:[#allocation7 + $0x7c] sm:$0xf]
        %v428 = vld [vmem:[%s3] sm:$0x1]
        %v430 = vlaneseq
        %v431 = vshrl.u32 %v430, 7
        %v432 = vsub.s32 0, %v431
        %v433 = vrot.slane %v428, %v432
        %v467 = vunpack.c.l.b16 %v396
        %v468 = vunpack.c.l.b16 %v397
        %v469 = vunpack.c.l.b16 %v398
        %v470 = vunpack.c.l.b16 %v399
        %v471 = vunpack.c.l.b16 %v400
        %v472 = vunpack.c.l.b16 %v401
        %v473 = vunpack.c.l.b16 %v402
        %v474 = vunpack.c.l.b16 %v403
        %v475 = vunpack.c.l.b16 %v404
        %v476 = vunpack.c.l.b16 %v405
        %v477 = vunpack.c.l.b16 %v406
        %v478 = vunpack.c.l.b16 %v407
        %v479 = vunpack.c.l.b16 %v408
        %v480 = vunpack.c.l.b16 %v409
        %v481 = vunpack.c.l.b16 %v410
        %v482 = vunpack.c.l.b16 %v411
        %v483 = vunpack.c.l.b16 %v412
        %v484 = vunpack.c.l.b16 %v413
        %v485 = vunpack.c.l.b16 %v414
        %v486 = vunpack.c.l.b16 %v415
        %v487 = vunpack.c.l.b16 %v416
        %v488 = vunpack.c.l.b16 %v417
        %v489 = vunpack.c.l.b16 %v418
        %v490 = vunpack.c.l.b16 %v419
        %v491 = vunpack.c.l.b16 %v420
        %v492 = vunpack.c.l.b16 %v421
        %v493 = vunpack.c.l.b16 %v422
        %v494 = vunpack.c.l.b16 %v423
        %v495 = vunpack.c.l.b16 %v424
        %v496 = vunpack.c.l.b16 %v425
        %v497 = vunpack.c.l.b16 %v426
        %v498 = vunpack.c.l.b16 %v427
        %v499 = vpack.c.b16 %v468, %v467
        %v500 = vpack.c.b16 %v470, %v469
        %v501 = vpack.c.b16 %v472, %v471
        %v502 = vpack.c.b16 %v474, %v473
        %v503 = vpack.c.b16 %v476, %v475
        %v504 = vpack.c.b16 %v478, %v477
        %v505 = vpack.c.b16 %v480, %v479
        %v506 = vpack.c.b16 %v482, %v481
        %v507 = vpack.c.b16 %v484, %v483
        %v508 = vpack.c.b16 %v486, %v485
        %v509 = vpack.c.b16 %v488, %v487
        %v510 = vpack.c.b16 %v490, %v489
        %v511 = vpack.c.b16 %v492, %v491
        %v512 = vpack.c.b16 %v494, %v493
        %v513 = vpack.c.b16 %v496, %v495
        %v514 = vpack.c.b16 %v498, %v497
        %531 = vmatprep.subr.bf16.mxu0 0
        %532 = vmatpush1.bf16.msra.mxu0 %v499
        %533 = vmatprep.subr.bf16.mxu0 0
        %534 = vmatpush1.bf16.msra.mxu0 %v500
        %535 = vmatprep.subr.bf16.mxu0 0
        %536 = vmatpush1.bf16.msra.mxu0 %v501
        %537 = vmatprep.subr.bf16.mxu0 0
        %538 = vmatpush1.bf16.msra.mxu0 %v502
        %539 = vmatprep.subr.bf16.mxu0 0
        %540 = vmatpush1.bf16.msra.mxu0 %v503
        %541 = vmatprep.subr.bf16.mxu0 0
        %542 = vmatpush1.bf16.msra.mxu0 %v504
        %543 = vmatprep.subr.bf16.mxu0 0
        %544 = vmatpush1.bf16.msra.mxu0 %v505
        %545 = vmatprep.subr.bf16.mxu0 0
        %546 = vmatpush1.bf16.msra.mxu0 %v506
        %547 = vmatprep.subr.bf16.mxu0 0
        %548 = vmatpush1.bf16.msra.mxu0 %v507
        %549 = vmatprep.subr.bf16.mxu0 0
        %550 = vmatpush1.bf16.msra.mxu0 %v508
        %551 = vmatprep.subr.bf16.mxu0 0
        %552 = vmatpush1.bf16.msra.mxu0 %v509
        %553 = vmatprep.subr.bf16.mxu0 0
        %554 = vmatpush1.bf16.msra.mxu0 %v510
        %555 = vmatprep.subr.bf16.mxu0 0
        %556 = vmatpush1.bf16.msra.mxu0 %v511
        %557 = vmatprep.subr.bf16.mxu0 0
        %558 = vmatpush1.bf16.msra.mxu0 %v512
        %559 = vmatprep.subr.bf16.mxu0 0
        %560 = vmatpush1.bf16.msra.mxu0 %v513
        %561 = vmatprep.subr.bf16.mxu0 0
        %562 = vmatpush1.bf16.msra.mxu0 %v514
        %563 = vmatprep.mubr.bf16.mxu0 %v344
        %564 = vmatmul.mubr.bf16.gmra.mrb[0].mxu0 %v395
        %v565 = vpop.f32.mrb[0].mxu0
        %v566 = vadd.f32 %v433, %v565
        %v567 = vpop.f32.mrb[0].mxu0
        %v568 = vpop.f32.mrb[0].mxu0
        %v569 = vadd.f32 %v433, %v568
        %v570 = vpop.f32.mrb[0].mxu0
        %571 = vdwg.mxu0
        %v572 = vadd.f32 %v342, %v566
        %v573 = vadd.f32 %v343, %v569
        %v574 = vmax.f32 %v572, 0.0
        %v575 = vmax.f32 %v573, 0.0
        %v576 = vpack.c.bf16 %v575, %v574
        %577 = vmatprep.subr.bf16.mxu0 0
        %578 = vmatpush1.bf16.msra.mxu0 %v576
        %579 = vmatprep.subr.bf16.mxu0 0
        %580 = vmatpush1.bf16.msra.mxu0 0
        %581 = vmatprep.subr.bf16.mxu0 0
        %582 = vmatpush1.bf16.msra.mxu0 0
        %583 = vmatprep.subr.bf16.mxu0 0
        %584 = vmatpush1.bf16.msra.mxu0 0
        %585 = vmatprep.subr.bf16.mxu0 0
        %586 = vmatpush1.bf16.msra.mxu0 0
        %587 = vmatprep.subr.bf16.mxu0 0
        %588 = vmatpush1.bf16.msra.mxu0 0
        %589 = vmatprep.subr.bf16.mxu0 0
        %590 = vmatpush1.bf16.msra.mxu0 0
        %591 = vmatprep.subr.bf16.mxu0 0
        %592 = vmatpush1.bf16.msra.mxu0 0
        %593 = vmatprep.subr.bf16.mxu0 0
        %594 = vmatpush1.bf16.msra.mxu0 0
        %595 = vmatprep.subr.bf16.mxu0 0
        %596 = vmatpush1.bf16.msra.mxu0 0
        %597 = vmatprep.subr.bf16.mxu0 0
        %598 = vmatpush1.bf16.msra.mxu0 0
        %599 = vmatprep.subr.bf16.mxu0 0
        %600 = vmatpush1.bf16.msra.mxu0 0
        %601 = vmatprep.subr.bf16.mxu0 0
        %602 = vmatpush1.bf16.msra.mxu0 0
        %603 = vmatprep.subr.bf16.mxu0 0
        %604 = vmatpush1.bf16.msra.mxu0 0
        %605 = vmatprep.subr.bf16.mxu0 0
        %606 = vmatpush1.bf16.msra.mxu0 0
        %607 = vmatprep.subr.bf16.mxu0 0
        %608 = vmatpush1.bf16.msra.mxu0 0
        %609 = vmatprep.mubr.bf16.mxu0 0
        %610 = vmatmul.mubr.bf16.gmra.mrb[0].mxu0 %v352
        %v611 = vpop.f32.mrb[0].mxu0
        %v612 = vadd.f32 0.0, %v611
        %v613 = vpop.f32.mrb[0].mxu0
        %v614 = vpop.f32.mrb[0].mxu0
        %v615 = vadd.f32 0.0, %v614
        %v616 = vpop.f32.mrb[0].mxu0
        %617 = vdwg.mxu0
        %v618 = vpack.c.bf16 %v615, %v612
        %s619 = scalar_lea.vmem [#allocation7], 128
        %v620 = vld [vmem:[%s619] sm:$0xf]
        %v621 = vld [vmem:[%s619 + $0x4] sm:$0xf]
        %v622 = vld [vmem:[%s619 + $0x8] sm:$0xf]
        %v623 = vld [vmem:[%s619 + $0xc] sm:$0xf]
        %v624 = vld [vmem:[%s619 + $0x10] sm:$0xf]
        %v625 = vld [vmem:[%s619 + $0x14] sm:$0xf]
        %v626 = vld [vmem:[%s619 + $0x18] sm:$0xf]
        %v627 = vld [vmem:[%s619 + $0x1c] sm:$0xf]
        %v628 = vld [vmem:[%s619 + $0x20] sm:$0xf]
        %v629 = vld [vmem:[%s619 + $0x24] sm:$0xf]
        %v630 = vld [vmem:[%s619 + $0x28] sm:$0xf]
        %v631 = vld [vmem:[%s619 + $0x2c] sm:$0xf]
        %v632 = vld [vmem:[%s619 + $0x30] sm:$0xf]
        %v633 = vld [vmem:[%s619 + $0x34] sm:$0xf]
        %v634 = vld [vmem:[%s619 + $0x38] sm:$0xf]
        %v635 = vld [vmem:[%s619 + $0x3c] sm:$0xf]
        %v636 = vld [vmem:[%s619 + $0x40] sm:$0xf]
        %v637 = vld [vmem:[%s619 + $0x44] sm:$0xf]
        %v638 = vld [vmem:[%s619 + $0x48] sm:$0xf]
        %v639 = vld [vmem:[%s619 + $0x4c] sm:$0xf]
        %v640 = vld [vmem:[%s619 + $0x50] sm:$0xf]
        %v641 = vld [vmem:[%s619 + $0x54] sm:$0xf]
        %v642 = vld [vmem:[%s619 + $0x58] sm:$0xf]
        %v643 = vld [vmem:[%s619 + $0x5c] sm:$0xf]
        %v644 = vld [vmem:[%s619 + $0x60] sm:$0xf]
        %v645 = vld [vmem:[%s619 + $0x64] sm:$0xf]
        %v646 = vld [vmem:[%s619 + $0x68] sm:$0xf]
        %v647 = vld [vmem:[%s619 + $0x6c] sm:$0xf]
        %v648 = vld [vmem:[%s619 + $0x70] sm:$0xf]
        %v649 = vld [vmem:[%s619 + $0x74] sm:$0xf]
        %v650 = vld [vmem:[%s619 + $0x78] sm:$0xf]
        %v651 = vld [vmem:[%s619 + $0x7c] sm:$0xf]
        %s652 = scalar_lea.vmem %s3, 1
        %v653 = vld [vmem:[%s652] sm:$0x1]
        %v655 = vlaneseq
        %v656 = vshrl.u32 %v655, 7
        %v657 = vsub.s32 0, %v656
        %v658 = vrot.slane %v653, %v657
        %v692 = vunpack.c.l.b16 %v620
        %v693 = vunpack.c.l.b16 %v621
        %v694 = vunpack.c.l.b16 %v622
        %v695 = vunpack.c.l.b16 %v623
        %v696 = vunpack.c.l.b16 %v624
        %v697 = vunpack.c.l.b16 %v625
        %v698 = vunpack.c.l.b16 %v626
        %v699 = vunpack.c.l.b16 %v627
        %v700 = vunpack.c.l.b16 %v628
        %v701 = vunpack.c.l.b16 %v629
        %v702 = vunpack.c.l.b16 %v630
        %v703 = vunpack.c.l.b16 %v631
        %v704 = vunpack.c.l.b16 %v632
        %v705 = vunpack.c.l.b16 %v633
        %v706 = vunpack.c.l.b16 %v634
        %v707 = vunpack.c.l.b16 %v635
        %v708 = vunpack.c.l.b16 %v636
        %v709 = vunpack.c.l.b16 %v637
        %v710 = vunpack.c.l.b16 %v638
        %v711 = vunpack.c.l.b16 %v639
        %v712 = vunpack.c.l.b16 %v640
        %v713 = vunpack.c.l.b16 %v641
        %v714 = vunpack.c.l.b16 %v642
        %v715 = vunpack.c.l.b16 %v643
        %v716 = vunpack.c.l.b16 %v644
        %v717 = vunpack.c.l.b16 %v645
        %v718 = vunpack.c.l.b16 %v646
        %v719 = vunpack.c.l.b16 %v647
        %v720 = vunpack.c.l.b16 %v648
        %v721 = vunpack.c.l.b16 %v649
        %v722 = vunpack.c.l.b16 %v650
        %v723 = vunpack.c.l.b16 %v651
        %v724 = vpack.c.b16 %v693, %v692
        %v725 = vpack.c.b16 %v695, %v694
        %v726 = vpack.c.b16 %v697, %v696
        %v727 = vpack.c.b16 %v699, %v698
        %v728 = vpack.c.b16 %v701, %v700
        %v729 = vpack.c.b16 %v703, %v702
        %v730 = vpack.c.b16 %v705, %v704
        %v731 = vpack.c.b16 %v707, %v706
        %v732 = vpack.c.b16 %v709, %v708
        %v733 = vpack.c.b16 %v711, %v710
        %v734 = vpack.c.b16 %v713, %v712
        %v735 = vpack.c.b16 %v715, %v714
        %v736 = vpack.c.b16 %v717, %v716
        %v737 = vpack.c.b16 %v719, %v718
        %v738 = vpack.c.b16 %v721, %v720
        %v739 = vpack.c.b16 %v723, %v722
        %756 = vmatprep.subr.bf16.mxu0 0
        %757 = vmatpush1.bf16.msra.mxu0 %v724
        %758 = vmatprep.subr.bf16.mxu0 0
        %759 = vmatpush1.bf16.msra.mxu0 %v725
        %760 = vmatprep.subr.bf16.mxu0 0
        %761 = vmatpush1.bf16.msra.mxu0 %v726
        %762 = vmatprep.subr.bf16.mxu0 0
        %763 = vmatpush1.bf16.msra.mxu0 %v727
        %764 = vmatprep.subr.bf16.mxu0 0
        %765 = vmatpush1.bf16.msra.mxu0 %v728
        %766 = vmatprep.subr.bf16.mxu0 0
        %767 = vmatpush1.bf16.msra.mxu0 %v729
        %768 = vmatprep.subr.bf16.mxu0 0
        %769 = vmatpush1.bf16.msra.mxu0 %v730
        %770 = vmatprep.subr.bf16.mxu0 0
        %771 = vmatpush1.bf16.msra.mxu0 %v731
        %772 = vmatprep.subr.bf16.mxu0 0
        %773 = vmatpush1.bf16.msra.mxu0 %v732
        %774 = vmatprep.subr.bf16.mxu0 0
        %775 = vmatpush1.bf16.msra.mxu0 %v733
        %776 = vmatprep.subr.bf16.mxu0 0
        %777 = vmatpush1.bf16.msra.mxu0 %v734
        %778 = vmatprep.subr.bf16.mxu0 0
        %779 = vmatpush1.bf16.msra.mxu0 %v735
        %780 = vmatprep.subr.bf16.mxu0 0
        %781 = vmatpush1.bf16.msra.mxu0 %v736
        %782 = vmatprep.subr.bf16.mxu0 0
        %783 = vmatpush1.bf16.msra.mxu0 %v737
        %784 = vmatprep.subr.bf16.mxu0 0
        %785 = vmatpush1.bf16.msra.mxu0 %v738
        %786 = vmatprep.subr.bf16.mxu0 0
        %787 = vmatpush1.bf16.msra.mxu0 %v739
        %788 = vmatprep.mubr.bf16.mxu0 %v576
        %789 = vmatmul.mubr.bf16.gmra.mrb[0].mxu0 %v618
        %v790 = vpop.f32.mrb[0].mxu0
        %v791 = vadd.f32 %v658, %v790
        %v792 = vpop.f32.mrb[0].mxu0
        %v793 = vpop.f32.mrb[0].mxu0
        %v794 = vadd.f32 %v658, %v793
        %v795 = vpop.f32.mrb[0].mxu0
        %796 = vdwg.mxu0
        %v797 = vadd.f32 %v574, %v791
        %v798 = vadd.f32 %v575, %v794
        %v799 = vmax.f32 %v797, 0.0
        %v800 = vmax.f32 %v798, 0.0
        %v801 = vpack.c.bf16 %v800, %v799
        %802 = vmatprep.subr.bf16.mxu0 0
        %803 = vmatpush1.bf16.msra.mxu0 %v801
        %804 = vmatprep.subr.bf16.mxu0 0
        %805 = vmatpush1.bf16.msra.mxu0 0
        %806 = vmatprep.subr.bf16.mxu0 0
        %807 = vmatpush1.bf16.msra.mxu0 0
        %808 = vmatprep.subr.bf16.mxu0 0
        %809 = vmatpush1.bf16.msra.mxu0 0
        %810 = vmatprep.subr.bf16.mxu0 0
        %811 = vmatpush1.bf16.msra.mxu0 0
        %812 = vmatprep.subr.bf16.mxu0 0
        %813 = vmatpush1.bf16.msra.mxu0 0
        %814 = vmatprep.subr.bf16.mxu0 0
        %815 = vmatpush1.bf16.msra.mxu0 0
        %816 = vmatprep.subr.bf16.mxu0 0
        %817 = vmatpush1.bf16.msra.mxu0 0
        %818 = vmatprep.subr.bf16.mxu0 0
        %819 = vmatpush1.bf16.msra.mxu0 0
        %820 = vmatprep.subr.bf16.mxu0 0
        %821 = vmatpush1.bf16.msra.mxu0 0
        %822 = vmatprep.subr.bf16.mxu0 0
        %823 = vmatpush1.bf16.msra.mxu0 0
        %824 = vmatprep.subr.bf16.mxu0 0
        %825 = vmatpush1.bf16.msra.mxu0 0
        %826 = vmatprep.subr.bf16.mxu0 0
        %827 = vmatpush1.bf16.msra.mxu0 0
        %828 = vmatprep.subr.bf16.mxu0 0
        %829 = vmatpush1.bf16.msra.mxu0 0
        %830 = vmatprep.subr.bf16.mxu0 0
        %831 = vmatpush1.bf16.msra.mxu0 0
        %832 = vmatprep.subr.bf16.mxu0 0
        %833 = vmatpush1.bf16.msra.mxu0 0
        %834 = vmatprep.mubr.bf16.mxu0 0
        %835 = vmatmul.mubr.bf16.gmra.mrb[0].mxu0 %v352
        %v836 = vpop.f32.mrb[0].mxu0
        %v837 = vadd.f32 0.0, %v836
        %v838 = vpop.f32.mrb[0].mxu0
        %v839 = vpop.f32.mrb[0].mxu0
        %v840 = vadd.f32 0.0, %v839
        %v841 = vpop.f32.mrb[0].mxu0
        %842 = vdwg.mxu0
        %v843 = vpack.c.bf16 %v840, %v837
        %s844 = scalar_lea.vmem [#allocation7], 256
        %v845 = vld [vmem:[%s844] sm:$0xf]
        %v846 = vld [vmem:[%s844 + $0x4] sm:$0xf]
        %v847 = vld [vmem:[%s844 + $0x8] sm:$0xf]
        %v848 = vld [vmem:[%s844 + $0xc] sm:$0xf]
        %v849 = vld [vmem:[%s844 + $0x10] sm:$0xf]
        %v850 = vld [vmem:[%s844 + $0x14] sm:$0xf]
        %v851 = vld [vmem:[%s844 + $0x18] sm:$0xf]
        %v852 = vld [vmem:[%s844 + $0x1c] sm:$0xf]
        %v853 = vld [vmem:[%s844 + $0x20] sm:$0xf]
        %v854 = vld [vmem:[%s844 + $0x24] sm:$0xf]
        %v855 = vld [vmem:[%s844 + $0x28] sm:$0xf]
        %v856 = vld [vmem:[%s844 + $0x2c] sm:$0xf]
        %v857 = vld [vmem:[%s844 + $0x30] sm:$0xf]
        %v858 = vld [vmem:[%s844 + $0x34] sm:$0xf]
        %v859 = vld [vmem:[%s844 + $0x38] sm:$0xf]
        %v860 = vld [vmem:[%s844 + $0x3c] sm:$0xf]
        %v861 = vld [vmem:[%s844 + $0x40] sm:$0xf]
        %v862 = vld [vmem:[%s844 + $0x44] sm:$0xf]
        %v863 = vld [vmem:[%s844 + $0x48] sm:$0xf]
        %v864 = vld [vmem:[%s844 + $0x4c] sm:$0xf]
        %v865 = vld [vmem:[%s844 + $0x50] sm:$0xf]
        %v866 = vld [vmem:[%s844 + $0x54] sm:$0xf]
        %v867 = vld [vmem:[%s844 + $0x58] sm:$0xf]
        %v868 = vld [vmem:[%s844 + $0x5c] sm:$0xf]
        %v869 = vld [vmem:[%s844 + $0x60] sm:$0xf]
        %v870 = vld [vmem:[%s844 + $0x64] sm:$0xf]
        %v871 = vld [vmem:[%s844 + $0x68] sm:$0xf]
        %v872 = vld [vmem:[%s844 + $0x6c] sm:$0xf]
        %v873 = vld [vmem:[%s844 + $0x70] sm:$0xf]
        %v874 = vld [vmem:[%s844 + $0x74] sm:$0xf]
        %v875 = vld [vmem:[%s844 + $0x78] sm:$0xf]
        %v876 = vld [vmem:[%s844 + $0x7c] sm:$0xf]
        %s877 = scalar_lea.vmem %s3, 2
        %v878 = vld [vmem:[%s877] sm:$0x1]
        %v880 = vlaneseq
        %v881 = vshrl.u32 %v880, 7
        %v882 = vsub.s32 0, %v881
        %v883 = vrot.slane %v878, %v882
        %v917 = vunpack.c.l.b16 %v845
        %v918 = vunpack.c.l.b16 %v846
        %v919 = vunpack.c.l.b16 %v847
        %v920 = vunpack.c.l.b16 %v848
        %v921 = vunpack.c.l.b16 %v849
        %v922 = vunpack.c.l.b16 %v850
        %v923 = vunpack.c.l.b16 %v851
        %v924 = vunpack.c.l.b16 %v852
        %v925 = vunpack.c.l.b16 %v853
        %v926 = vunpack.c.l.b16 %v854
        %v927 = vunpack.c.l.b16 %v855
        %v928 = vunpack.c.l.b16 %v856
        %v929 = vunpack.c.l.b16 %v857
        %v930 = vunpack.c.l.b16 %v858
        %v931 = vunpack.c.l.b16 %v859
        %v932 = vunpack.c.l.b16 %v860
        %v933 = vunpack.c.l.b16 %v861
        %v934 = vunpack.c.l.b16 %v862
        %v935 = vunpack.c.l.b16 %v863
        %v936 = vunpack.c.l.b16 %v864
        %v937 = vunpack.c.l.b16 %v865
        %v938 = vunpack.c.l.b16 %v866
        %v939 = vunpack.c.l.b16 %v867
        %v940 = vunpack.c.l.b16 %v868
        %v941 = vunpack.c.l.b16 %v869
        %v942 = vunpack.c.l.b16 %v870
        %v943 = vunpack.c.l.b16 %v871
        %v944 = vunpack.c.l.b16 %v872
        %v945 = vunpack.c.l.b16 %v873
        %v946 = vunpack.c.l.b16 %v874
        %v947 = vunpack.c.l.b16 %v875
        %v948 = vunpack.c.l.b16 %v876
        %v949 = vpack.c.b16 %v918, %v917
        %v950 = vpack.c.b16 %v920, %v919
        %v951 = vpack.c.b16 %v922, %v921
        %v952 = vpack.c.b16 %v924, %v923
        %v953 = vpack.c.b16 %v926, %v925
        %v954 = vpack.c.b16 %v928, %v927
        %v955 = vpack.c.b16 %v930, %v929
        %v956 = vpack.c.b16 %v932, %v931
        %v957 = vpack.c.b16 %v934, %v933
        %v958 = vpack.c.b16 %v936, %v935
        %v959 = vpack.c.b16 %v938, %v937
        %v960 = vpack.c.b16 %v940, %v939
        %v961 = vpack.c.b16 %v942, %v941
        %v962 = vpack.c.b16 %v944, %v943
        %v963 = vpack.c.b16 %v946, %v945
        %v964 = vpack.c.b16 %v948, %v947
        %981 = vmatprep.subr.bf16.mxu0 0
        %982 = vmatpush1.bf16.msra.mxu0 %v949
        %983 = vmatprep.subr.bf16.mxu0 0
        %984 = vmatpush1.bf16.msra.mxu0 %v950
        %985 = vmatprep.subr.bf16.mxu0 0
        %986 = vmatpush1.bf16.msra.mxu0 %v951
        %987 = vmatprep.subr.bf16.mxu0 0
        %988 = vmatpush1.bf16.msra.mxu0 %v952
        %989 = vmatprep.subr.bf16.mxu0 0
        %990 = vmatpush1.bf16.msra.mxu0 %v953
        %991 = vmatprep.subr.bf16.mxu0 0
        %992 = vmatpush1.bf16.msra.mxu0 %v954
        %993 = vmatprep.subr.bf16.mxu0 0
        %994 = vmatpush1.bf16.msra.mxu0 %v955
        %995 = vmatprep.subr.bf16.mxu0 0
        %996 = vmatpush1.bf16.msra.mxu0 %v956
        %997 = vmatprep.subr.bf16.mxu0 0
        %998 = vmatpush1.bf16.msra.mxu0 %v957
        %999 = vmatprep.subr.bf16.mxu0 0
        %1000 = vmatpush1.bf16.msra.mxu0 %v958
        %1001 = vmatprep.subr.bf16.mxu0 0
        %1002 = vmatpush1.bf16.msra.mxu0 %v959
        %1003 = vmatprep.subr.bf16.mxu0 0
        %1004 = vmatpush1.bf16.msra.mxu0 %v960
        %1005 = vmatprep.subr.bf16.mxu0 0
        %1006 = vmatpush1.bf16.msra.mxu0 %v961
        %1007 = vmatprep.subr.bf16.mxu0 0
        %1008 = vmatpush1.bf16.msra.mxu0 %v962
        %1009 = vmatprep.subr.bf16.mxu0 0
        %1010 = vmatpush1.bf16.msra.mxu0 %v963
        %1011 = vmatprep.subr.bf16.mxu0 0
        %1012 = vmatpush1.bf16.msra.mxu0 %v964
        %1013 = vmatprep.mubr.bf16.mxu0 %v801
        %1014 = vmatmul.mubr.bf16.gmra.mrb[0].mxu0 %v843
        %v1015 = vpop.f32.mrb[0].mxu0
        %v1016 = vadd.f32 %v883, %v1015
        %v1017 = vpop.f32.mrb[0].mxu0
        %v1018 = vpop.f32.mrb[0].mxu0
        %v1019 = vadd.f32 %v883, %v1018
        %v1020 = vpop.f32.mrb[0].mxu0
        %1021 = vdwg.mxu0
        %v1022 = vadd.f32 %v799, %v1016
        %v1023 = vadd.f32 %v800, %v1019
        %v1024 = vmax.f32 %v1022, 0.0
        %v1025 = vmax.f32 %v1023, 0.0
        %v1026 = vpack.c.bf16 %v1025, %v1024
        %1027 = vmatprep.subr.bf16.mxu0 0
        %1028 = vmatpush1.bf16.msra.mxu0 %v1026
        %1029 = vmatprep.subr.bf16.mxu0 0
        %1030 = vmatpush1.bf16.msra.mxu0 0
        %1031 = vmatprep.subr.bf16.mxu0 0
        %1032 = vmatpush1.bf16.msra.mxu0 0
        %1033 = vmatprep.subr.bf16.mxu0 0
        %1034 = vmatpush1.bf16.msra.mxu0 0
        %1035 = vmatprep.subr.bf16.mxu0 0
        %1036 = vmatpush1.bf16.msra.mxu0 0
        %1037 = vmatprep.subr.bf16.mxu0 0
        %1038 = vmatpush1.bf16.msra.mxu0 0
        %1039 = vmatprep.subr.bf16.mxu0 0
        %1040 = vmatpush1.bf16.msra.mxu0 0
        %1041 = vmatprep.subr.bf16.mxu0 0
        %1042 = vmatpush1.bf16.msra.mxu0 0
        %1043 = vmatprep.subr.bf16.mxu0 0
        %1044 = vmatpush1.bf16.msra.mxu0 0
        %1045 = vmatprep.subr.bf16.mxu0 0
        %1046 = vmatpush1.bf16.msra.mxu0 0
        %1047 = vmatprep.subr.bf16.mxu0 0
        %1048 = vmatpush1.bf16.msra.mxu0 0
        %1049 = vmatprep.subr.bf16.mxu0 0
        %1050 = vmatpush1.bf16.msra.mxu0 0
        %1051 = vmatprep.subr.bf16.mxu0 0
        %1052 = vmatpush1.bf16.msra.mxu0 0
        %1053 = vmatprep.subr.bf16.mxu0 0
        %1054 = vmatpush1.bf16.msra.mxu0 0
        %1055 = vmatprep.subr.bf16.mxu0 0
        %1056 = vmatpush1.bf16.msra.mxu0 0
        %1057 = vmatprep.subr.bf16.mxu0 0
        %1058 = vmatpush1.bf16.msra.mxu0 0
        %1059 = vmatprep.mubr.bf16.mxu0 0
        %1060 = vmatmul.mubr.bf16.gmra.mrb[0].mxu0 %v352
        %v1061 = vpop.f32.mrb[0].mxu0
        %v1062 = vadd.f32 0.0, %v1061
        %v1063 = vpop.f32.mrb[0].mxu0
        %v1064 = vpop.f32.mrb[0].mxu0
        %v1065 = vadd.f32 0.0, %v1064
        %v1066 = vpop.f32.mrb[0].mxu0
        %1067 = vdwg.mxu0
        %v1068 = vpack.c.bf16 %v1065, %v1062
        %s1069 = scalar_lea.vmem [#allocation7], 384
        %v1070 = vld [vmem:[%s1069] sm:$0xf]
        %v1071 = vld [vmem:[%s1069 + $0x4] sm:$0xf]
        %v1072 = vld [vmem:[%s1069 + $0x8] sm:$0xf]
        %v1073 = vld [vmem:[%s1069 + $0xc] sm:$0xf]
        %v1074 = vld [vmem:[%s1069 + $0x10] sm:$0xf]
        %v1075 = vld [vmem:[%s1069 + $0x14] sm:$0xf]
        %v1076 = vld [vmem:[%s1069 + $0x18] sm:$0xf]
        %v1077 = vld [vmem:[%s1069 + $0x1c] sm:$0xf]
        %v1078 = vld [vmem:[%s1069 + $0x20] sm:$0xf]
        %v1079 = vld [vmem:[%s1069 + $0x24] sm:$0xf]
        %v1080 = vld [vmem:[%s1069 + $0x28] sm:$0xf]
        %v1081 = vld [vmem:[%s1069 + $0x2c] sm:$0xf]
        %v1082 = vld [vmem:[%s1069 + $0x30] sm:$0xf]
        %v1083 = vld [vmem:[%s1069 + $0x34] sm:$0xf]
        %v1084 = vld [vmem:[%s1069 + $0x38] sm:$0xf]
        %v1085 = vld [vmem:[%s1069 + $0x3c] sm:$0xf]
        %v1086 = vld [vmem:[%s1069 + $0x40] sm:$0xf]
        %v1087 = vld [vmem:[%s1069 + $0x44] sm:$0xf]
        %v1088 = vld [vmem:[%s1069 + $0x48] sm:$0xf]
        %v1089 = vld [vmem:[%s1069 + $0x4c] sm:$0xf]
        %v1090 = vld [vmem:[%s1069 + $0x50] sm:$0xf]
        %v1091 = vld [vmem:[%s1069 + $0x54] sm:$0xf]
        %v1092 = vld [vmem:[%s1069 + $0x58] sm:$0xf]
        %v1093 = vld [vmem:[%s1069 + $0x5c] sm:$0xf]
        %v1094 = vld [vmem:[%s1069 + $0x60] sm:$0xf]
        %v1095 = vld [vmem:[%s1069 + $0x64] sm:$0xf]
        %v1096 = vld [vmem:[%s1069 + $0x68] sm:$0xf]
        %v1097 = vld [vmem:[%s1069 + $0x6c] sm:$0xf]
        %v1098 = vld [vmem:[%s1069 + $0x70] sm:$0xf]
        %v1099 = vld [vmem:[%s1069 + $0x74] sm:$0xf]
        %v1100 = vld [vmem:[%s1069 + $0x78] sm:$0xf]
        %v1101 = vld [vmem:[%s1069 + $0x7c] sm:$0xf]
        %s1102 = scalar_lea.vmem %s3, 3
        %v1103 = vld [vmem:[%s1102] sm:$0x1]
        %v1105 = vlaneseq
        %v1106 = vshrl.u32 %v1105, 7
        %v1107 = vsub.s32 0, %v1106
        %v1108 = vrot.slane %v1103, %v1107
        %v1142 = vunpack.c.l.b16 %v1070
        %v1143 = vunpack.c.l.b16 %v1071
        %v1144 = vunpack.c.l.b16 %v1072
        %v1145 = vunpack.c.l.b16 %v1073
        %v1146 = vunpack.c.l.b16 %v1074
        %v1147 = vunpack.c.l.b16 %v1075
        %v1148 = vunpack.c.l.b16 %v1076
        %v1149 = vunpack.c.l.b16 %v1077
        %v1150 = vunpack.c.l.b16 %v1078
        %v1151 = vunpack.c.l.b16 %v1079
        %v1152 = vunpack.c.l.b16 %v1080
        %v1153 = vunpack.c.l.b16 %v1081
        %v1154 = vunpack.c.l.b16 %v1082
        %v1155 = vunpack.c.l.b16 %v1083
        %v1156 = vunpack.c.l.b16 %v1084
        %v1157 = vunpack.c.l.b16 %v1085
        %v1158 = vunpack.c.l.b16 %v1086
        %v1159 = vunpack.c.l.b16 %v1087
        %v1160 = vunpack.c.l.b16 %v1088
        %v1161 = vunpack.c.l.b16 %v1089
        %v1162 = vunpack.c.l.b16 %v1090
        %v1163 = vunpack.c.l.b16 %v1091
        %v1164 = vunpack.c.l.b16 %v1092
        %v1165 = vunpack.c.l.b16 %v1093
        %v1166 = vunpack.c.l.b16 %v1094
        %v1167 = vunpack.c.l.b16 %v1095
        %v1168 = vunpack.c.l.b16 %v1096
        %v1169 = vunpack.c.l.b16 %v1097
        %v1170 = vunpack.c.l.b16 %v1098
        %v1171 = vunpack.c.l.b16 %v1099
        %v1172 = vunpack.c.l.b16 %v1100
        %v1173 = vunpack.c.l.b16 %v1101
        %v1174 = vpack.c.b16 %v1143, %v1142
        %v1175 = vpack.c.b16 %v1145, %v1144
        %v1176 = vpack.c.b16 %v1147, %v1146
        %v1177 = vpack.c.b16 %v1149, %v1148
        %v1178 = vpack.c.b16 %v1151, %v1150
        %v1179 = vpack.c.b16 %v1153, %v1152
        %v1180 = vpack.c.b16 %v1155, %v1154
        %v1181 = vpack.c.b16 %v1157, %v1156
        %v1182 = vpack.c.b16 %v1159, %v1158
        %v1183 = vpack.c.b16 %v1161, %v1160
        %v1184 = vpack.c.b16 %v1163, %v1162
        %v1185 = vpack.c.b16 %v1165, %v1164
        %v1186 = vpack.c.b16 %v1167, %v1166
        %v1187 = vpack.c.b16 %v1169, %v1168
        %v1188 = vpack.c.b16 %v1171, %v1170
        %v1189 = vpack.c.b16 %v1173, %v1172
        %1206 = vmatprep.subr.bf16.mxu0 0
        %1207 = vmatpush1.bf16.msra.mxu0 %v1174
        %1208 = vmatprep.subr.bf16.mxu0 0
        %1209 = vmatpush1.bf16.msra.mxu0 %v1175
        %1210 = vmatprep.subr.bf16.mxu0 0
        %1211 = vmatpush1.bf16.msra.mxu0 %v1176
        %1212 = vmatprep.subr.bf16.mxu0 0
        %1213 = vmatpush1.bf16.msra.mxu0 %v1177
        %1214 = vmatprep.subr.bf16.mxu0 0
        %1215 = vmatpush1.bf16.msra.mxu0 %v1178
        %1216 = vmatprep.subr.bf16.mxu0 0
        %1217 = vmatpush1.bf16.msra.mxu0 %v1179
        %1218 = vmatprep.subr.bf16.mxu0 0
        %1219 = vmatpush1.bf16.msra.mxu0 %v1180
        %1220 = vmatprep.subr.bf16.mxu0 0
        %1221 = vmatpush1.bf16.msra.mxu0 %v1181
        %1222 = vmatprep.subr.bf16.mxu0 0
        %1223 = vmatpush1.bf16.msra.mxu0 %v1182
        %1224 = vmatprep.subr.bf16.mxu0 0
        %1225 = vmatpush1.bf16.msra.mxu0 %v1183
        %1226 = vmatprep.subr.bf16.mxu0 0
        %1227 = vmatpush1.bf16.msra.mxu0 %v1184
        %1228 = vmatprep.subr.bf16.mxu0 0
        %1229 = vmatpush1.bf16.msra.mxu0 %v1185
        %1230 = vmatprep.subr.bf16.mxu0 0
        %1231 = vmatpush1.bf16.msra.mxu0 %v1186
        %1232 = vmatprep.subr.bf16.mxu0 0
        %1233 = vmatpush1.bf16.msra.mxu0 %v1187
        %1234 = vmatprep.subr.bf16.mxu0 0
        %1235 = vmatpush1.bf16.msra.mxu0 %v1188
        %1236 = vmatprep.subr.bf16.mxu0 0
        %1237 = vmatpush1.bf16.msra.mxu0 %v1189
        %1238 = vmatprep.mubr.bf16.mxu0 %v1026
        %1239 = vmatmul.mubr.bf16.gmra.mrb[0].mxu0 %v1068
        %v1240 = vpop.f32.mrb[0].mxu0
        %v1241 = vadd.f32 %v1108, %v1240
        %v1242 = vpop.f32.mrb[0].mxu0
        %v1243 = vpop.f32.mrb[0].mxu0
        %v1244 = vadd.f32 %v1108, %v1243
        %v1245 = vpop.f32.mrb[0].mxu0
        %1246 = vdwg.mxu0
        %v1247 = vadd.f32 %v1024, %v1241
        %v1248 = vadd.f32 %v1025, %v1244
        %v1249 = vmax.f32 %v1247, 0.0
        %v1250 = vmax.f32 %v1248, 0.0
        %v1251 = vpack.c.bf16 %v1250, %v1249
        %1252 = vmatprep.subr.bf16.mxu0 0
        %1253 = vmatpush1.bf16.msra.mxu0 %v1251
        %1254 = vmatprep.subr.bf16.mxu0 0
        %1255 = vmatpush1.bf16.msra.mxu0 0
        %1256 = vmatprep.subr.bf16.mxu0 0
        %1257 = vmatpush1.bf16.msra.mxu0 0
        %1258 = vmatprep.subr.bf16.mxu0 0
        %1259 = vmatpush1.bf16.msra.mxu0 0
        %1260 = vmatprep.subr.bf16.mxu0 0
        %1261 = vmatpush1.bf16.msra.mxu0 0
        %1262 = vmatprep.subr.bf16.mxu0 0
        %1263 = vmatpush1.bf16.msra.mxu0 0
        %1264 = vmatprep.subr.bf16.mxu0 0
        %1265 = vmatpush1.bf16.msra.mxu0 0
        %1266 = vmatprep.subr.bf16.mxu0 0
        %1267 = vmatpush1.bf16.msra.mxu0 0
        %1268 = vmatprep.subr.bf16.mxu0 0
        %1269 = vmatpush1.bf16.msra.mxu0 0
        %1270 = vmatprep.subr.bf16.mxu0 0
        %1271 = vmatpush1.bf16.msra.mxu0 0
        %1272 = vmatprep.subr.bf16.mxu0 0
        %1273 = vmatpush1.bf16.msra.mxu0 0
        %1274 = vmatprep.subr.bf16.mxu0 0
        %1275 = vmatpush1.bf16.msra.mxu0 0
        %1276 = vmatprep.subr.bf16.mxu0 0
        %1277 = vmatpush1.bf16.msra.mxu0 0
        %1278 = vmatprep.subr.bf16.mxu0 0
        %1279 = vmatpush1.bf16.msra.mxu0 0
        %1280 = vmatprep.subr.bf16.mxu0 0
        %1281 = vmatpush1.bf16.msra.mxu0 0
        %1282 = vmatprep.subr.bf16.mxu0 0
        %1283 = vmatpush1.bf16.msra.mxu0 0
        %1284 = vmatprep.mubr.bf16.mxu0 0
        %1285 = vmatmul.mubr.bf16.gmra.mrb[0].mxu0 %v352
        %v1286 = vpop.f32.mrb[0].mxu0
        %v1287 = vadd.f32 0.0, %v1286
        %v1288 = vpop.f32.mrb[0].mxu0
        %v1289 = vpop.f32.mrb[0].mxu0
        %v1290 = vadd.f32 0.0, %v1289
        %v1291 = vpop.f32.mrb[0].mxu0
        %1292 = vdwg.mxu0
        %v1293 = vpack.c.bf16 %v1290, %v1287
        %s1294 = scalar_lea.vmem [#allocation7], 512
        %v1295 = vld [vmem:[%s1294] sm:$0xf]
        %v1296 = vld [vmem:[%s1294 + $0x4] sm:$0xf]
        %v1297 = vld [vmem:[%s1294 + $0x8] sm:$0xf]
        %v1298 = vld [vmem:[%s1294 + $0xc] sm:$0xf]
        %v1299 = vld [vmem:[%s1294 + $0x10] sm:$0xf]
        %v1300 = vld [vmem:[%s1294 + $0x14] sm:$0xf]
        %v1301 = vld [vmem:[%s1294 + $0x18] sm:$0xf]
        %v1302 = vld [vmem:[%s1294 + $0x1c] sm:$0xf]
        %v1303 = vld [vmem:[%s1294 + $0x20] sm:$0xf]
        %v1304 = vld [vmem:[%s1294 + $0x24] sm:$0xf]
        %v1305 = vld [vmem:[%s1294 + $0x28] sm:$0xf]
        %v1306 = vld [vmem:[%s1294 + $0x2c] sm:$0xf]
        %v1307 = vld [vmem:[%s1294 + $0x30] sm:$0xf]
        %v1308 = vld [vmem:[%s1294 + $0x34] sm:$0xf]
        %v1309 = vld [vmem:[%s1294 + $0x38] sm:$0xf]
        %v1310 = vld [vmem:[%s1294 + $0x3c] sm:$0xf]
        %v1311 = vld [vmem:[%s1294 + $0x40] sm:$0xf]
        %v1312 = vld [vmem:[%s1294 + $0x44] sm:$0xf]
        %v1313 = vld [vmem:[%s1294 + $0x48] sm:$0xf]
        %v1314 = vld [vmem:[%s1294 + $0x4c] sm:$0xf]
        %v1315 = vld [vmem:[%s1294 + $0x50] sm:$0xf]
        %v1316 = vld [vmem:[%s1294 + $0x54] sm:$0xf]
        %v1317 = vld [vmem:[%s1294 + $0x58] sm:$0xf]
        %v1318 = vld [vmem:[%s1294 + $0x5c] sm:$0xf]
        %v1319 = vld [vmem:[%s1294 + $0x60] sm:$0xf]
        %v1320 = vld [vmem:[%s1294 + $0x64] sm:$0xf]
        %v1321 = vld [vmem:[%s1294 + $0x68] sm:$0xf]
        %v1322 = vld [vmem:[%s1294 + $0x6c] sm:$0xf]
        %v1323 = vld [vmem:[%s1294 + $0x70] sm:$0xf]
        %v1324 = vld [vmem:[%s1294 + $0x74] sm:$0xf]
        %v1325 = vld [vmem:[%s1294 + $0x78] sm:$0xf]
        %v1326 = vld [vmem:[%s1294 + $0x7c] sm:$0xf]
        %s1327 = scalar_lea.vmem %s3, 4
        %v1328 = vld [vmem:[%s1327] sm:$0x1]
        %v1330 = vlaneseq
        %v1331 = vshrl.u32 %v1330, 7
        %v1332 = vsub.s32 0, %v1331
        %v1333 = vrot.slane %v1328, %v1332
        %v1367 = vunpack.c.l.b16 %v1295
        %v1368 = vunpack.c.l.b16 %v1296
        %v1369 = vunpack.c.l.b16 %v1297
        %v1370 = vunpack.c.l.b16 %v1298
        %v1371 = vunpack.c.l.b16 %v1299
        %v1372 = vunpack.c.l.b16 %v1300
        %v1373 = vunpack.c.l.b16 %v1301
        %v1374 = vunpack.c.l.b16 %v1302
        %v1375 = vunpack.c.l.b16 %v1303
        %v1376 = vunpack.c.l.b16 %v1304
        %v1377 = vunpack.c.l.b16 %v1305
        %v1378 = vunpack.c.l.b16 %v1306
        %v1379 = vunpack.c.l.b16 %v1307
        %v1380 = vunpack.c.l.b16 %v1308
        %v1381 = vunpack.c.l.b16 %v1309
        %v1382 = vunpack.c.l.b16 %v1310
        %v1383 = vunpack.c.l.b16 %v1311
        %v1384 = vunpack.c.l.b16 %v1312
        %v1385 = vunpack.c.l.b16 %v1313
        %v1386 = vunpack.c.l.b16 %v1314
        %v1387 = vunpack.c.l.b16 %v1315
        %v1388 = vunpack.c.l.b16 %v1316
        %v1389 = vunpack.c.l.b16 %v1317
        %v1390 = vunpack.c.l.b16 %v1318
        %v1391 = vunpack.c.l.b16 %v1319
        %v1392 = vunpack.c.l.b16 %v1320
        %v1393 = vunpack.c.l.b16 %v1321
        %v1394 = vunpack.c.l.b16 %v1322
        %v1395 = vunpack.c.l.b16 %v1323
        %v1396 = vunpack.c.l.b16 %v1324
        %v1397 = vunpack.c.l.b16 %v1325
        %v1398 = vunpack.c.l.b16 %v1326
        %v1399 = vpack.c.b16 %v1368, %v1367
        %v1400 = vpack.c.b16 %v1370, %v1369
        %v1401 = vpack.c.b16 %v1372, %v1371
        %v1402 = vpack.c.b16 %v1374, %v1373
        %v1403 = vpack.c.b16 %v1376, %v1375
        %v1404 = vpack.c.b16 %v1378, %v1377
        %v1405 = vpack.c.b16 %v1380, %v1379
        %v1406 = vpack.c.b16 %v1382, %v1381
        %v1407 = vpack.c.b16 %v1384, %v1383
        %v1408 = vpack.c.b16 %v1386, %v1385
        %v1409 = vpack.c.b16 %v1388, %v1387
        %v1410 = vpack.c.b16 %v1390, %v1389
        %v1411 = vpack.c.b16 %v1392, %v1391
        %v1412 = vpack.c.b16 %v1394, %v1393
        %v1413 = vpack.c.b16 %v1396, %v1395
        %v1414 = vpack.c.b16 %v1398, %v1397
        %1431 = vmatprep.subr.bf16.mxu0 0
        %1432 = vmatpush1.bf16.msra.mxu0 %v1399
        %1433 = vmatprep.subr.bf16.mxu0 0
        %1434 = vmatpush1.bf16.msra.mxu0 %v1400
        %1435 = vmatprep.subr.bf16.mxu0 0
        %1436 = vmatpush1.bf16.msra.mxu0 %v1401
        %1437 = vmatprep.subr.bf16.mxu0 0
        %1438 = vmatpush1.bf16.msra.mxu0 %v1402
        %1439 = vmatprep.subr.bf16.mxu0 0
        %1440 = vmatpush1.bf16.msra.mxu0 %v1403
        %1441 = vmatprep.subr.bf16.mxu0 0
        %1442 = vmatpush1.bf16.msra.mxu0 %v1404
        %1443 = vmatprep.subr.bf16.mxu0 0
        %1444 = vmatpush1.bf16.msra.mxu0 %v1405
        %1445 = vmatprep.subr.bf16.mxu0 0
        %1446 = vmatpush1.bf16.msra.mxu0 %v1406
        %1447 = vmatprep.subr.bf16.mxu0 0
        %1448 = vmatpush1.bf16.msra.mxu0 %v1407
        %1449 = vmatprep.subr.bf16.mxu0 0
        %1450 = vmatpush1.bf16.msra.mxu0 %v1408
        %1451 = vmatprep.subr.bf16.mxu0 0
        %1452 = vmatpush1.bf16.msra.mxu0 %v1409
        %1453 = vmatprep.subr.bf16.mxu0 0
        %1454 = vmatpush1.bf16.msra.mxu0 %v1410
        %1455 = vmatprep.subr.bf16.mxu0 0
        %1456 = vmatpush1.bf16.msra.mxu0 %v1411
        %1457 = vmatprep.subr.bf16.mxu0 0
        %1458 = vmatpush1.bf16.msra.mxu0 %v1412
        %1459 = vmatprep.subr.bf16.mxu0 0
        %1460 = vmatpush1.bf16.msra.mxu0 %v1413
        %1461 = vmatprep.subr.bf16.mxu0 0
        %1462 = vmatpush1.bf16.msra.mxu0 %v1414
        %1463 = vmatprep.mubr.bf16.mxu0 %v1251
        %1464 = vmatmul.mubr.bf16.gmra.mrb[0].mxu0 %v1293
        %v1465 = vpop.f32.mrb[0].mxu0
        %v1466 = vadd.f32 %v1333, %v1465
        %v1467 = vpop.f32.mrb[0].mxu0
        %v1468 = vpop.f32.mrb[0].mxu0
        %v1469 = vadd.f32 %v1333, %v1468
        %v1470 = vpop.f32.mrb[0].mxu0
        %1471 = vdwg.mxu0
        %v1472 = vadd.f32 %v1249, %v1466
        %v1473 = vadd.f32 %v1250, %v1469
        %v1474 = vpack.c.bf16 %v1473, %v1472
        %v1475 = vld [vmem:[#allocation8] sm:$0xf]
        %v1476 = vld [vmem:[#allocation8 + $0x4] sm:$0xf]
        %v1477 = vld [vmem:[#allocation8 + $0x8] sm:$0xf]
        %v1478 = vld [vmem:[#allocation8 + $0xc] sm:$0xf]
        %v1479 = vld [vmem:[#allocation8 + $0x10] sm:$0xf]
        %v1480 = vld [vmem:[#allocation8 + $0x14] sm:$0xf]
        %v1481 = vld [vmem:[#allocation8 + $0x18] sm:$0xf]
        %v1482 = vld [vmem:[#allocation8 + $0x1c] sm:$0xf]
        %v1483 = vld [vmem:[#allocation8 + $0x20] sm:$0xf]
        %v1484 = vld [vmem:[#allocation8 + $0x24] sm:$0xf]
        %v1485 = vld [vmem:[#allocation8 + $0x28] sm:$0xf]
        %v1486 = vld [vmem:[#allocation8 + $0x2c] sm:$0xf]
        %v1487 = vld [vmem:[#allocation8 + $0x30] sm:$0xf]
        %v1488 = vld [vmem:[#allocation8 + $0x34] sm:$0xf]
        %v1489 = vld [vmem:[#allocation8 + $0x38] sm:$0xf]
        %v1490 = vld [vmem:[#allocation8 + $0x3c] sm:$0xf]
        %v1491 = vld [vmem:[%s5] sm:$0x1]
        %v1493 = vlaneseq
        %v1494 = vshrl.u32 %v1493, 7
        %v1495 = vsub.s32 0, %v1494
        %v1496 = vrot.slane %v1491, %v1495
        %v1514 = vunpack.c.l.b16 %v1475
        %v1515 = vunpack.c.l.b16 %v1476
        %v1516 = vunpack.c.l.b16 %v1477
        %v1517 = vunpack.c.l.b16 %v1478
        %v1518 = vunpack.c.l.b16 %v1479
        %v1519 = vunpack.c.l.b16 %v1480
        %v1520 = vunpack.c.l.b16 %v1481
        %v1521 = vunpack.c.l.b16 %v1482
        %v1522 = vunpack.c.l.b16 %v1483
        %v1523 = vunpack.c.l.b16 %v1484
        %v1524 = vunpack.c.l.b16 %v1485
        %v1525 = vunpack.c.l.b16 %v1486
        %v1526 = vunpack.c.l.b16 %v1487
        %v1527 = vunpack.c.l.b16 %v1488
        %v1528 = vunpack.c.l.b16 %v1489
        %v1529 = vunpack.c.l.b16 %v1490
        %v1530 = vpack.c.b16 %v1515, %v1514
        %v1531 = vpack.c.b16 %v1517, %v1516
        %v1532 = vpack.c.b16 %v1519, %v1518
        %v1533 = vpack.c.b16 %v1521, %v1520
        %v1534 = vpack.c.b16 %v1523, %v1522
        %v1535 = vpack.c.b16 %v1525, %v1524
        %v1536 = vpack.c.b16 %v1527, %v1526
        %v1537 = vpack.c.b16 %v1529, %v1528
        %1546 = vmatprep.subr.bf16.mxu0 0
        %1547 = vmatpush1.bf16.msra.mxu0 %v1530
        %1548 = vmatprep.subr.bf16.mxu0 0
        %1549 = vmatpush1.bf16.msra.mxu0 %v1531
        %1550 = vmatprep.subr.bf16.mxu0 0
        %1551 = vmatpush1.bf16.msra.mxu0 %v1532
        %1552 = vmatprep.subr.bf16.mxu0 0
        %1553 = vmatpush1.bf16.msra.mxu0 %v1533
        %1554 = vmatprep.subr.bf16.mxu0 0
        %1555 = vmatpush1.bf16.msra.mxu0 %v1534
        %1556 = vmatprep.subr.bf16.mxu0 0
        %1557 = vmatpush1.bf16.msra.mxu0 %v1535
        %1558 = vmatprep.subr.bf16.mxu0 0
        %1559 = vmatpush1.bf16.msra.mxu0 %v1536
        %1560 = vmatprep.subr.bf16.mxu0 0
        %1561 = vmatpush1.bf16.msra.mxu0 %v1537
        %1562 = vmatprep.subr.bf16.mxu0 0
        %1563 = vmatpush1.bf16.msra.mxu0 0
        %1564 = vmatprep.subr.bf16.mxu0 0
        %1565 = vmatpush1.bf16.msra.mxu0 0
        %1566 = vmatprep.subr.bf16.mxu0 0
        %1567 = vmatpush1.bf16.msra.mxu0 0
        %1568 = vmatprep.subr.bf16.mxu0 0
        %1569 = vmatpush1.bf16.msra.mxu0 0
        %1570 = vmatprep.subr.bf16.mxu0 0
        %1571 = vmatpush1.bf16.msra.mxu0 0
        %1572 = vmatprep.subr.bf16.mxu0 0
        %1573 = vmatpush1.bf16.msra.mxu0 0
        %1574 = vmatprep.subr.bf16.mxu0 0
        %1575 = vmatpush1.bf16.msra.mxu0 0
        %1576 = vmatprep.subr.bf16.mxu0 0
        %1577 = vmatpush1.bf16.msra.mxu0 0
        %1578 = vmatprep.mubr.bf16.mxu0 0
        %1579 = vmatmul.mubr.bf16.gmra.mrb[0].mxu0 %v1474
        %v1580 = vpop.f32.mrb[0].mxu0
        %v1581 = vadd.f32 %v1496, %v1580
        %v1582 = vpop.f32.mrb[0].mxu0
        %v1583 = vpop.f32.mrb[0].mxu0
        %v1584 = vadd.f32 %v1496, %v1583
        %v1585 = vpop.f32.mrb[0].mxu0
        %1586 = vdwg.mxu0
        %1587 = vst [vmem:[%s338] sm:$0xff] %v1581
        %1588 = vst [vmem:[%s338 + $0x8] sm:$0xff] %v1584
        %s1589 = sand.u32 %s171, 1
        %s1590 = scalar_lea.sflag [#allocation4], %s1589
        %s1591 = sand.u32 %s171, 1
        %s1592 = smul.addr %s1591, 16
        %s1593 = scalar_lea.vmem [#allocation10], %s1592
        // Predicated region
        $region61: #{tpu_custom_call.1} parent=43 // pred_check
          %p1594 = pneg %p181
        $region62: #{tpu_custom_call.1} parent=43 // pred_check_branch
          %1596 = sbr.rel (%p1594) target = $region64
        $region63: #{tpu_custom_call.1} parent=43 // pred_region
          %s1598 = ssub.s32 256, 256
          %1599 = vsyncadd %s1590, %s1598
          %s1600 = smul.addr %s27, 2
          %s1601 = smul.addr %s1600, 128
          %s1602 = scalar_lea.hbm %s6, %s1601
          %s1603 = sshll.u32 %s1593, 4
          %s1604 = int_to_ptr.vmem [resolvable:$true] %s1603
          %1609 = dma.vmem_to_hbm [thread:$0]  %s1604, 256, %s1602, %s1590, 128, 128, 8
        $region64: #{tpu_custom_call.1} parent=43 // pred_fallthru
          _
      $region44: #{tpu_custom_call.1} parent=5 // pred_fallthru
        _
      %p1610 = scmp.le.s32.totalorder 2, %s22
      // Predicated region
      $region65: #{tpu_custom_call.1} parent=5 // pred_check
        %p1611 = pneg %p1610
      $region66: #{tpu_custom_call.1} parent=5 // pred_check_branch
        %1613 = sbr.rel (%p1611) target = $region68
      $region67: #{tpu_custom_call.1} parent=5 // pred_region
        %s1614 = ssub.s32 %s22, 2
        // Predicated region
        $region69: #{tpu_custom_call.1} parent=67 // pred_check
          %p1615 = pneg %p187
        $region70: #{tpu_custom_call.1} parent=67 // pred_check_branch
          %1617 = sbr.rel (%p1615) target = $region72
        $region71: #{tpu_custom_call.1} parent=67 // pred_region
          %s1618 = sand.u32 %s172, 1
          %s1619 = scalar_lea.sflag [#allocation4], %s1618
          %s1620 = sand.u32 %s172, 1
          %s1621 = smul.addr %s1620, 16
          %s1622 = scalar_lea.vmem [#allocation10], %s1621
          %1623 = dma.done %s1619, 256
        $region72: #{tpu_custom_call.1} parent=67 // pred_fallthru
          _
      $region68: #{tpu_custom_call.1} parent=5 // pred_fallthru
        _
    $region6: #{tpu_custom_call.1} parent=1 // loop_footer
      %s26 = sadd.s32 1, %s22
    $region7: #{tpu_custom_call.1} parent=1 // loop_footer_branch
      %21 = sbr.rel target = $region3
    $region8: #{tpu_custom_call.1} parent=1 // loop_exit
      _
    %1624 = vsyncpa [#allocation3], 1
    %s1625 = scalar_lea.sflag [#allocation3], 1
    %1626 = vsyncpa %s1625, 1
    %1627 = vsyncpa [#allocation6], 1
    %s1628 = scalar_lea.sflag [#allocation6], 1
    %1629 = vsyncpa %s1628, 1
    %1630 = vsyncpa [#allocation9], 1
    %1631 = vsyncpa [#allocation4], 1
    %s1632 = scalar_lea.sflag [#allocation4], 1
    %1633 = vsyncpa %s1632, 1

</llo_original>
